<compile_context>
chip_gen: v5e
topology: v5e:2x2
jax: 0.10.0
libtpu: 0.0.40
codegen_flags: <defaults>
</compile_context>

<pallas_src>
import math
import functools

import jax
import jax.numpy as jnp
from jax.experimental import pallas as pl
from jax.experimental.pallas import tpu as pltpu


# ------------------------------------------------------------------ kernels ---

def kv_proj_kernel(k_ref, v_ref, wk_ref, bk_ref, wv_ref, bv_ref,
                   kp_ref, vp_ref, *, n_heads):
    """Per-batch K/V projections, written per head as (H, nk, d_k) bf16."""
    k = k_ref[...]                                   # (nk, d_model) bf16
    v = v_ref[...]                                   # (nk, d_model) bf16
    for h in range(n_heads):                         # n_heads is small -> unrolled
        kp = jnp.dot(k, wk_ref[h], preferred_element_type=jnp.float32) + bk_ref[h]
        vp = jnp.dot(v, wv_ref[h], preferred_element_type=jnp.float32) + bv_ref[h]
        kp_ref[h] = kp.astype(kp_ref.dtype)
        vp_ref[h] = vp.astype(vp_ref.dtype)


def attention_kernel(q_ref, kp_ref, vp_ref, wq_ref, bq_ref, wo_ref, bo_ref,
                     o_ref, ctx_ref, *, n_heads, d_k):
    # q_ref:  (tq, d_model) bf16            kp_ref/vp_ref: (H, nk, d_k) bf16
    # wq_ref: (H, d_model, d_k) bf16 (1/sqrt(d_k) folded in), bq_ref: (H, 1, d_k) f32
    # wo_ref: (d_model, d_model) bf16        bo_ref: (1, d_model) f32
    # ctx_ref: (tq, d_model) bf16 VMEM scratch (merged per-head context slab)
    q = q_ref[...]
    for h in range(n_heads):                         # n_heads is small -> unrolled
        # Per-head scaled Q projection: full d_model-deep MXU contraction.
        qh = (jnp.dot(q, wq_ref[h], preferred_element_type=jnp.float32)
              + bq_ref[h]).astype(jnp.bfloat16)      # (tq, d_k)
        kh = kp_ref[h]                               # (nk, d_k)
        vh = vp_ref[h]                               # (nk, d_k)

        # scores = q_h @ k_h^T without materializing a transpose.
        s = jax.lax.dot_general(qh, kh, (((1,), (1,)), ((), ())),
                                preferred_element_type=jnp.float32)   # (tq, nk)

        # Softmax over keys: elementwise path stays f32 (v5e has no bf16 VPU/EUP);
        # the divide goes to the EUP slot via the approximate reciprocal.
        m = jnp.max(s, axis=-1, keepdims=True)
        e = jnp.exp(s - m)
        p = (e * pl.reciprocal(jnp.sum(e, axis=-1, keepdims=True),
                               approx=True)).astype(jnp.bfloat16)

        oh = jnp.dot(p, vh, preferred_element_type=jnp.float32)        # (tq, d_k)

        # Merge-heads: drop o_h into its lane slot of the context slab.
        ctx_ref[:, h * d_k:(h + 1) * d_k] = oh.astype(ctx_ref.dtype)

    # Single deep output projection over the merged slab.
    out = jnp.dot(ctx_ref[...], wo_ref[...],
                  preferred_element_type=jnp.float32) + bo_ref[...]
    o_ref[...] = out.astype(o_ref.dtype)


# ------------------------------------------------------------------ helpers ---

def _spec(shape, index_map, single_buffer):
    """BlockSpec whose block index never changes: request 1 pipeline buffer."""
    if single_buffer:
        return pl.BlockSpec(shape, index_map, pipeline_mode=pl.Buffered(1))
    return pl.BlockSpec(shape, index_map)


def _vmem_limit_bytes():
    # ~3/4 of physical VMEM: 48 MiB on v7x (64 MiB), 96 MiB on v5e/v6e (128 MiB).
    try:
        return int(pltpu.get_tpu_info().vmem_capacity_bytes) * 3 // 4
    except Exception:
        return 48 * 1024 * 1024


def _forward_impl(qb, kb, vb, wq_h, bq_h, wk_h, bk_h, wv_h, bv_h, wo_t, bo2,
                  n_heads, d_k, tq, single_buffer):
    B, nq, d_model = qb.shape
    nk = kb.shape[1]
    vmem_limit = _vmem_limit_bytes()

    # --- K/V projections: once per batch element (grid = (B,)). -----------------
    kv_proj = pl.pallas_call(
        functools.partial(kv_proj_kernel, n_heads=n_heads),
        out_shape=(jax.ShapeDtypeStruct((B, n_heads, nk, d_k), jnp.bfloat16),
                   jax.ShapeDtypeStruct((B, n_heads, nk, d_k), jnp.bfloat16)),
        grid=(B,),
        in_specs=[
            pl.BlockSpec((None, nk, d_model), lambda b: (b, 0, 0)),                 # k
            pl.BlockSpec((None, nk, d_model), lambda b: (b, 0, 0)),                 # v
            _spec((n_heads, d_model, d_k), lambda b: (0, 0, 0), single_buffer),     # Wk per head
            _spec((n_heads, 1, d_k), lambda b: (0, 0, 0), single_buffer),           # bk per head
            _spec((n_heads, d_model, d_k), lambda b: (0, 0, 0), single_buffer),     # Wv per head
            _spec((n_heads, 1, d_k), lambda b: (0, 0, 0), single_buffer),           # bv per head
        ],
        out_specs=(
            pl.BlockSpec((None, n_heads, nk, d_k), lambda b: (b, 0, 0, 0)),
            pl.BlockSpec((None, n_heads, nk, d_k), lambda b: (b, 0, 0, 0)),
        ),
        compiler_params=pltpu.CompilerParams(
            dimension_semantics=("parallel",),
            vmem_limit_bytes=vmem_limit,
        ),
    )
    kp, vp = kv_proj(kb, vb, wk_h, bk_h, wv_h, bv_h)

    # --- Fused attention: grid = (batch, q-tiles), both parallel (megacore). ----
    grid = (B, nq // tq)
    attn = pl.pallas_call(
        functools.partial(attention_kernel, n_heads=n_heads, d_k=d_k),
        out_shape=jax.ShapeDtypeStruct((B, nq, d_model), jnp.float32),
        grid=grid,
        in_specs=[
            pl.BlockSpec((None, tq, d_model), lambda b, i: (b, i, 0)),                   # q (pipelined)
            _spec((None, n_heads, nk, d_k), lambda b, i: (b, 0, 0, 0), single_buffer),   # kp
            _spec((None, n_heads, nk, d_k), lambda b, i: (b, 0, 0, 0), single_buffer),   # vp
            _spec((n_heads, d_model, d_k), lambda b, i: (0, 0, 0), single_buffer),       # Wq per head (scaled)
            _spec((n_heads, 1, d_k), lambda b, i: (0, 0, 0), single_buffer),             # bq per head (scaled)
            _spec((d_model, d_model), lambda b, i: (0, 0), single_buffer),               # Wo^T
            _spec((1, d_model), lambda b, i: (0, 0), single_buffer),                     # bo
        ],
        out_specs=pl.BlockSpec((None, tq, d_model), lambda b, i: (b, i, 0)),
        scratch_shapes=[pltpu.VMEM((tq, d_model), jnp.bfloat16)],                        # ctx slab
        compiler_params=pltpu.CompilerParams(
            dimension_semantics=("parallel", "parallel"),
            vmem_limit_bytes=vmem_limit,
        ),
    )
    return attn(qb, kp, vp, wq_h, bq_h, wo_t, bo2)


# ------------------------------------------------------------------ wrapper ---

def memory_attention_forward(q, k, v, params, n_heads, *, attention_mask=None,
                             attention_weights=None, q_tile=256):
    """Replicates MemoryAttention.forward for the n_memories=0 branch."""
    assert attention_mask is None and attention_weights is None, (
        "only the attention_mask=None / attention_weights=None branch is implemented")
    wq, bq, wk, bk, wv, bv, wo, bo = params
    B, nq, d_model = q.shape
    assert d_model % n_heads == 0
    d_k = d_model // n_heads
    scale = 1.0 / math.sqrt(d_k)

    def per_head(w):  # nn.Linear weight (d_out, d_in) -> (H, d_in, d_k), transposed
        return jnp.transpose(w.reshape(n_heads, d_k, d_model), (0, 2, 1))

    # Host-side (cheap, once per call) weight prep:
    #  * per-head (H, d_model, d_k) layouts -> no in-kernel transposes / lane slicing
    #  * 1/sqrt(d_k) folded into the Q projection (weight and bias)
    #  * bf16 storage for every MXU operand; biases stay f32
    wq_h = per_head(wq * scale).astype(jnp.bfloat16)
    bq_h = (bq * scale).reshape(n_heads, 1, d_k).astype(jnp.float32)
    wk_h = per_head(wk).astype(jnp.bfloat16)
    bk_h = bk.reshape(n_heads, 1, d_k).astype(jnp.float32)
    wv_h = per_head(wv).astype(jnp.bfloat16)
    bv_h = bv.reshape(n_heads, 1, d_k).astype(jnp.float32)
    wo_t = wo.T.astype(jnp.bfloat16)                       # (d_in, d_out)
    bo2 = bo.reshape(1, d_model).astype(jnp.float32)

    qb = q.astype(jnp.bfloat16)
    kb = k.astype(jnp.bfloat16)
    vb = v.astype(jnp.bfloat16)

    tq = nq if nq <= q_tile else q_tile
    assert nq % tq == 0, "q sequence length must be divisible by the q tile"

    args = (qb, kb, vb, wq_h, bq_h, wk_h, bk_h, wv_h, bv_h, wo_t, bo2,
            n_heads, d_k, tq)
    try:
        out = _forward_impl(*args, single_buffer=True)
        jax.block_until_ready(out)
        return out
    except Exception:
        # pl.Buffered(1) not supported on this jax build -> default double buffering.
        return _forward_impl(*args, single_buffer=False)


# -------------------------------------------------------------- param init ----

def make_params(key, d_model):
    """xavier_uniform_ for weights, zeros for biases (matches init_params)."""
    bound = math.sqrt(6.0 / (d_model + d_model))
    keys = jax.random.split(key, 4)
    params = []
    for kk in keys:
        w = jax.random.uniform(kk, (d_model, d_model), jnp.float32, -bound, bound)
        b = jnp.zeros((d_model,), jnp.float32)
        params.extend([w, b])
    return tuple(params)   # (wq, bq, wk, bk, wv, bv, wo, bo)


# -------------------------------------------------------------- pure-JAX ref --

def reference_forward(q, k, v, params, n_heads):
    wq, bq, wk, bk, wv, bv, wo, bo = params
    B, nq, d_model = q.shape
    nk = k.shape[1]
    d_k = d_model // n_heads
    hi = jax.lax.Precision.HIGHEST
    qp = jnp.einsum('bqe,oe->bqo', q, wq, precision=hi) + bq
    kp = jnp.einsum('bke,oe->bko', k, wk, precision=hi) + bk
    vp = jnp.einsum('bke,oe->bko', v, wv, precision=hi) + bv
    qh = qp.reshape(B, nq, n_heads, d_k).transpose(0, 2, 1, 3)
    kh = kp.reshape(B, nk, n_heads, d_k).transpose(0, 2, 1, 3)
    vh = vp.reshape(B, nk, n_heads, d_k).transpose(0, 2, 1, 3)
    s = jnp.einsum('bhqd,bhkd->bhqk', qh, kh, precision=hi) / math.sqrt(d_k)
    p = jax.nn.softmax(s, axis=-1)
    o = jnp.einsum('bhqk,bhkd->bhqd', p, vh, precision=hi)
    o = o.transpose(0, 2, 1, 3).reshape(B, nq, d_model)
    return jnp.einsum('bqe,oe->bqo', o, wo, precision=hi) + bo


# ------------------------------------------------------------------- main -----

if __name__ == "__main__":
    d_model, n_heads = 32, 4
    B, nq, nk = 2, 8, 8

    root = jax.random.PRNGKey(0)
    k_param, k_q, k_k, k_v = jax.random.split(root, 4)

    params = make_params(k_param, d_model)
    q = jax.random.normal(k_q, (B, nq, d_model), jnp.float32)
    k = jax.random.normal(k_k, (B, nk, d_model), jnp.float32)
    v = jax.random.normal(k_v, (B, nk, d_model), jnp.float32)

    out = memory_attention_forward(q, k, v, params, n_heads)
    jax.block_until_ready(out)
    assert out.shape == (B, nq, d_model)
    assert out.dtype == jnp.float32

    ref = reference_forward(q, k, v, params, n_heads)
    max_err = float(jnp.max(jnp.abs(out - ref)))
    # bf16 MXU inputs -> validate with a relative-style tolerance vs the f32 ref.
    tol = 2e-2 + 3e-2 * float(jnp.max(jnp.abs(ref)))
    assert max_err < tol, f"mismatch vs reference: max abs err {max_err} (tol {tol})"

    print("KERNEL_OK")
</pallas_src>

<mosaic_0001>
module attributes {stable_mosaic.version = 11 : i64} {
  func.func @kv_proj_kernel(%arg0: i32, %arg1: memref<1x8x32xbf16, #tpu.memory_space<vmem>>, %arg2: memref<1x8x32xbf16, #tpu.memory_space<vmem>>, %arg3: memref<4x32x8xbf16, #tpu.memory_space<vmem>>, %arg4: memref<4x1x8xf32, #tpu.memory_space<vmem>>, %arg5: memref<4x32x8xbf16, #tpu.memory_space<vmem>>, %arg6: memref<4x1x8xf32, #tpu.memory_space<vmem>>, %arg7: memref<1x4x8x8xbf16, #tpu.memory_space<vmem>>, %arg8: memref<1x4x8x8xbf16, #tpu.memory_space<vmem>>) attributes {dimension_semantics = [#tpu.dimension_semantics<parallel>], iteration_bounds = array<i64: 2>, scalar_prefetch = 0 : i64, scratch_operands = 0 : i64, tpu.core_type = #tpu.core_type<tc>, window_params = [{transform_indices = @transform_0, window_bounds = array<i64: 1, 8, 32>}, {transform_indices = @transform_1, window_bounds = array<i64: 1, 8, 32>}, {pipeline_mode = #tpu.pipeline_mode<synchronous>, transform_indices = @transform_2, window_bounds = array<i64: 4, 32, 8>}, {pipeline_mode = #tpu.pipeline_mode<synchronous>, transform_indices = @transform_3, window_bounds = array<i64: 4, 1, 8>}, {pipeline_mode = #tpu.pipeline_mode<synchronous>, transform_indices = @transform_4, window_bounds = array<i64: 4, 32, 8>}, {pipeline_mode = #tpu.pipeline_mode<synchronous>, transform_indices = @transform_5, window_bounds = array<i64: 4, 1, 8>}, {transform_indices = @transform_6, window_bounds = array<i64: 1, 4, 8, 8>}, {transform_indices = @transform_7, window_bounds = array<i64: 1, 4, 8, 8>}]} {
    %c0 = arith.constant 0 : index
    %c0_0 = arith.constant 0 : index
    %c0_1 = arith.constant 0 : index
    %0 = vector.load %arg1[%c0, %c0_0, %c0_1] : memref<1x8x32xbf16, #tpu.memory_space<vmem>>, vector<1x8x32xbf16>
    %1 = vector.shape_cast %0 : vector<1x8x32xbf16> to vector<8x32xbf16>
    %c0_2 = arith.constant 0 : index
    %c0_3 = arith.constant 0 : index
    %c0_4 = arith.constant 0 : index
    %2 = vector.load %arg2[%c0_2, %c0_3, %c0_4] : memref<1x8x32xbf16, #tpu.memory_space<vmem>>, vector<1x8x32xbf16>
    %3 = vector.shape_cast %2 : vector<1x8x32xbf16> to vector<8x32xbf16>
    %c0_5 = arith.constant 0 : index
    %c0_6 = arith.constant 0 : index
    %c0_7 = arith.constant 0 : index
    %4 = vector.load %arg3[%c0_5, %c0_6, %c0_7] : memref<4x32x8xbf16, #tpu.memory_space<vmem>>, vector<1x32x8xbf16>
    %5 = vector.shape_cast %4 : vector<1x32x8xbf16> to vector<32x8xbf16>
    %cst = arith.constant dense<0.000000e+00> : vector<8x8xf32>
    %6 = tpu.matmul %1, %5, %cst {dimension_numbers = #tpu.dot_dimension_numbers<[1], [0], [0], [1], [0, 0, 1, 1], [], []>} : vector<8x32xbf16>, vector<32x8xbf16>, vector<8x8xf32> -> vector<8x8xf32>
    %c0_8 = arith.constant 0 : index
    %c0_9 = arith.constant 0 : index
    %c0_10 = arith.constant 0 : index
    %7 = vector.load %arg4[%c0_8, %c0_9, %c0_10] : memref<4x1x8xf32, #tpu.memory_space<vmem>>, vector<1x1x8xf32>
    %8 = vector.shape_cast %7 : vector<1x1x8xf32> to vector<1x8xf32>
    %9 = vector.broadcast %8 : vector<1x8xf32> to vector<8x8xf32>
    %10 = arith.addf %6, %9 : vector<8x8xf32>
    %c0_11 = arith.constant 0 : index
    %c0_12 = arith.constant 0 : index
    %c0_13 = arith.constant 0 : index
    %11 = vector.load %arg5[%c0_11, %c0_12, %c0_13] : memref<4x32x8xbf16, #tpu.memory_space<vmem>>, vector<1x32x8xbf16>
    %12 = vector.shape_cast %11 : vector<1x32x8xbf16> to vector<32x8xbf16>
    %cst_14 = arith.constant dense<0.000000e+00> : vector<8x8xf32>
    %13 = tpu.matmul %3, %12, %cst_14 {dimension_numbers = #tpu.dot_dimension_numbers<[1], [0], [0], [1], [0, 0, 1, 1], [], []>} : vector<8x32xbf16>, vector<32x8xbf16>, vector<8x8xf32> -> vector<8x8xf32>
    %c0_15 = arith.constant 0 : index
    %c0_16 = arith.constant 0 : index
    %c0_17 = arith.constant 0 : index
    %14 = vector.load %arg6[%c0_15, %c0_16, %c0_17] : memref<4x1x8xf32, #tpu.memory_space<vmem>>, vector<1x1x8xf32>
    %15 = vector.shape_cast %14 : vector<1x1x8xf32> to vector<1x8xf32>
    %16 = vector.broadcast %15 : vector<1x8xf32> to vector<8x8xf32>
    %17 = arith.addf %13, %16 : vector<8x8xf32>
    %18 = arith.truncf %10 : vector<8x8xf32> to vector<8x8xbf16>
    %c0_18 = arith.constant 0 : index
    %c0_19 = arith.constant 0 : index
    %c0_20 = arith.constant 0 : index
    %c0_21 = arith.constant 0 : index
    %19 = vector.load %arg7[%c0_18, %c0_19, %c0_20, %c0_21] : memref<1x4x8x8xbf16, #tpu.memory_space<vmem>>, vector<1x1x8x8xbf16>
    %20 = vector.shape_cast %19 : vector<1x1x8x8xbf16> to vector<8x8xbf16>
    %21 = vector.shape_cast %18 : vector<8x8xbf16> to vector<1x1x8x8xbf16>
    tpu.vector_store %arg7[%c0_18, %c0_19, %c0_20, %c0_21], %21 {strides = array<i32>} : memref<1x4x8x8xbf16, #tpu.memory_space<vmem>>, vector<1x1x8x8xbf16>,
    %22 = arith.truncf %17 : vector<8x8xf32> to vector<8x8xbf16>
    %c0_22 = arith.constant 0 : index
    %c0_23 = arith.constant 0 : index
    %c0_24 = arith.constant 0 : index
    %c0_25 = arith.constant 0 : index
    %23 = vector.load %arg8[%c0_22, %c0_23, %c0_24, %c0_25] : memref<1x4x8x8xbf16, #tpu.memory_space<vmem>>, vector<1x1x8x8xbf16>
    %24 = vector.shape_cast %23 : vector<1x1x8x8xbf16> to vector<8x8xbf16>
    %25 = vector.shape_cast %22 : vector<8x8xbf16> to vector<1x1x8x8xbf16>
    tpu.vector_store %arg8[%c0_22, %c0_23, %c0_24, %c0_25], %25 {strides = array<i32>} : memref<1x4x8x8xbf16, #tpu.memory_space<vmem>>, vector<1x1x8x8xbf16>,
    %c1 = arith.constant 1 : index
    %c0_26 = arith.constant 0 : index
    %c0_27 = arith.constant 0 : index
    %26 = vector.load %arg3[%c1, %c0_26, %c0_27] : memref<4x32x8xbf16, #tpu.memory_space<vmem>>, vector<1x32x8xbf16>
    %27 = vector.shape_cast %26 : vector<1x32x8xbf16> to vector<32x8xbf16>
    %cst_28 = arith.constant dense<0.000000e+00> : vector<8x8xf32>
    %28 = tpu.matmul %1, %27, %cst_28 {dimension_numbers = #tpu.dot_dimension_numbers<[1], [0], [0], [1], [0, 0, 1, 1], [], []>} : vector<8x32xbf16>, vector<32x8xbf16>, vector<8x8xf32> -> vector<8x8xf32>
    %c1_29 = arith.constant 1 : index
    %c0_30 = arith.constant 0 : index
    %c0_31 = arith.constant 0 : index
    %29 = vector.load %arg4[%c1_29, %c0_30, %c0_31] : memref<4x1x8xf32, #tpu.memory_space<vmem>>, vector<1x1x8xf32>
    %30 = vector.shape_cast %29 : vector<1x1x8xf32> to vector<1x8xf32>
    %31 = vector.broadcast %30 : vector<1x8xf32> to vector<8x8xf32>
    %32 = arith.addf %28, %31 : vector<8x8xf32>
    %c1_32 = arith.constant 1 : index
    %c0_33 = arith.constant 0 : index
    %c0_34 = arith.constant 0 : index
    %33 = vector.load %arg5[%c1_32, %c0_33, %c0_34] : memref<4x32x8xbf16, #tpu.memory_space<vmem>>, vector<1x32x8xbf16>
    %34 = vector.shape_cast %33 : vector<1x32x8xbf16> to vector<32x8xbf16>
    %cst_35 = arith.constant dense<0.000000e+00> : vector<8x8xf32>
    %35 = tpu.matmul %3, %34, %cst_35 {dimension_numbers = #tpu.dot_dimension_numbers<[1], [0], [0], [1], [0, 0, 1, 1], [], []>} : vector<8x32xbf16>, vector<32x8xbf16>, vector<8x8xf32> -> vector<8x8xf32>
    %c1_36 = arith.constant 1 : index
    %c0_37 = arith.constant 0 : index
    %c0_38 = arith.constant 0 : index
    %36 = vector.load %arg6[%c1_36, %c0_37, %c0_38] : memref<4x1x8xf32, #tpu.memory_space<vmem>>, vector<1x1x8xf32>
    %37 = vector.shape_cast %36 : vector<1x1x8xf32> to vector<1x8xf32>
    %38 = vector.broadcast %37 : vector<1x8xf32> to vector<8x8xf32>
    %39 = arith.addf %35, %38 : vector<8x8xf32>
    %40 = arith.truncf %32 : vector<8x8xf32> to vector<8x8xbf16>
    %c0_39 = arith.constant 0 : index
    %c1_40 = arith.constant 1 : index
    %c0_41 = arith.constant 0 : index
    %c0_42 = arith.constant 0 : index
    %41 = vector.load %arg7[%c0_39, %c1_40, %c0_41, %c0_42] : memref<1x4x8x8xbf16, #tpu.memory_space<vmem>>, vector<1x1x8x8xbf16>
    %42 = vector.shape_cast %41 : vector<1x1x8x8xbf16> to vector<8x8xbf16>
    %43 = vector.shape_cast %40 : vector<8x8xbf16> to vector<1x1x8x8xbf16>
    tpu.vector_store %arg7[%c0_39, %c1_40, %c0_41, %c0_42], %43 {strides = array<i32>} : memref<1x4x8x8xbf16, #tpu.memory_space<vmem>>, vector<1x1x8x8xbf16>,
    %44 = arith.truncf %39 : vector<8x8xf32> to vector<8x8xbf16>
    %c0_43 = arith.constant 0 : index
    %c1_44 = arith.constant 1 : index
    %c0_45 = arith.constant 0 : index
    %c0_46 = arith.constant 0 : index
    %45 = vector.load %arg8[%c0_43, %c1_44, %c0_45, %c0_46] : memref<1x4x8x8xbf16, #tpu.memory_space<vmem>>, vector<1x1x8x8xbf16>
    %46 = vector.shape_cast %45 : vector<1x1x8x8xbf16> to vector<8x8xbf16>
    %47 = vector.shape_cast %44 : vector<8x8xbf16> to vector<1x1x8x8xbf16>
    tpu.vector_store %arg8[%c0_43, %c1_44, %c0_45, %c0_46], %47 {strides = array<i32>} : memref<1x4x8x8xbf16, #tpu.memory_space<vmem>>, vector<1x1x8x8xbf16>,
    %c2 = arith.constant 2 : index
    %c0_47 = arith.constant 0 : index
    %c0_48 = arith.constant 0 : index
    %48 = vector.load %arg3[%c2, %c0_47, %c0_48] : memref<4x32x8xbf16, #tpu.memory_space<vmem>>, vector<1x32x8xbf16>
    %49 = vector.shape_cast %48 : vector<1x32x8xbf16> to vector<32x8xbf16>
    %cst_49 = arith.constant dense<0.000000e+00> : vector<8x8xf32>
    %50 = tpu.matmul %1, %49, %cst_49 {dimension_numbers = #tpu.dot_dimension_numbers<[1], [0], [0], [1], [0, 0, 1, 1], [], []>} : vector<8x32xbf16>, vector<32x8xbf16>, vector<8x8xf32> -> vector<8x8xf32>
    %c2_50 = arith.constant 2 : index
    %c0_51 = arith.constant 0 : index
    %c0_52 = arith.constant 0 : index
    %51 = vector.load %arg4[%c2_50, %c0_51, %c0_52] : memref<4x1x8xf32, #tpu.memory_space<vmem>>, vector<1x1x8xf32>
    %52 = vector.shape_cast %51 : vector<1x1x8xf32> to vector<1x8xf32>
    %53 = vector.broadcast %52 : vector<1x8xf32> to vector<8x8xf32>
    %54 = arith.addf %50, %53 : vector<8x8xf32>
    %c2_53 = arith.constant 2 : index
    %c0_54 = arith.constant 0 : index
    %c0_55 = arith.constant 0 : index
    %55 = vector.load %arg5[%c2_53, %c0_54, %c0_55] : memref<4x32x8xbf16, #tpu.memory_space<vmem>>, vector<1x32x8xbf16>
    %56 = vector.shape_cast %55 : vector<1x32x8xbf16> to vector<32x8xbf16>
    %cst_56 = arith.constant dense<0.000000e+00> : vector<8x8xf32>
    %57 = tpu.matmul %3, %56, %cst_56 {dimension_numbers = #tpu.dot_dimension_numbers<[1], [0], [0], [1], [0, 0, 1, 1], [], []>} : vector<8x32xbf16>, vector<32x8xbf16>, vector<8x8xf32> -> vector<8x8xf32>
    %c2_57 = arith.constant 2 : index
    %c0_58 = arith.constant 0 : index
    %c0_59 = arith.constant 0 : index
    %58 = vector.load %arg6[%c2_57, %c0_58, %c0_59] : memref<4x1x8xf32, #tpu.memory_space<vmem>>, vector<1x1x8xf32>
    %59 = vector.shape_cast %58 : vector<1x1x8xf32> to vector<1x8xf32>
    %60 = vector.broadcast %59 : vector<1x8xf32> to vector<8x8xf32>
    %61 = arith.addf %57, %60 : vector<8x8xf32>
    %62 = arith.truncf %54 : vector<8x8xf32> to vector<8x8xbf16>
    %c0_60 = arith.constant 0 : index
    %c2_61 = arith.constant 2 : index
    %c0_62 = arith.constant 0 : index
    %c0_63 = arith.constant 0 : index
    %63 = vector.load %arg7[%c0_60, %c2_61, %c0_62, %c0_63] : memref<1x4x8x8xbf16, #tpu.memory_space<vmem>>, vector<1x1x8x8xbf16>
    %64 = vector.shape_cast %63 : vector<1x1x8x8xbf16> to vector<8x8xbf16>
    %65 = vector.shape_cast %62 : vector<8x8xbf16> to vector<1x1x8x8xbf16>
    tpu.vector_store %arg7[%c0_60, %c2_61, %c0_62, %c0_63], %65 {strides = array<i32>} : memref<1x4x8x8xbf16, #tpu.memory_space<vmem>>, vector<1x1x8x8xbf16>,
    %66 = arith.truncf %61 : vector<8x8xf32> to vector<8x8xbf16>
    %c0_64 = arith.constant 0 : index
    %c2_65 = arith.constant 2 : index
    %c0_66 = arith.constant 0 : index
    %c0_67 = arith.constant 0 : index
    %67 = vector.load %arg8[%c0_64, %c2_65, %c0_66, %c0_67] : memref<1x4x8x8xbf16, #tpu.memory_space<vmem>>, vector<1x1x8x8xbf16>
    %68 = vector.shape_cast %67 : vector<1x1x8x8xbf16> to vector<8x8xbf16>
    %69 = vector.shape_cast %66 : vector<8x8xbf16> to vector<1x1x8x8xbf16>
    tpu.vector_store %arg8[%c0_64, %c2_65, %c0_66, %c0_67], %69 {strides = array<i32>} : memref<1x4x8x8xbf16, #tpu.memory_space<vmem>>, vector<1x1x8x8xbf16>,
    %c3 = arith.constant 3 : index
    %c0_68 = arith.constant 0 : index
    %c0_69 = arith.constant 0 : index
    %70 = vector.load %arg3[%c3, %c0_68, %c0_69] : memref<4x32x8xbf16, #tpu.memory_space<vmem>>, vector<1x32x8xbf16>
    %71 = vector.shape_cast %70 : vector<1x32x8xbf16> to vector<32x8xbf16>
    %cst_70 = arith.constant dense<0.000000e+00> : vector<8x8xf32>
    %72 = tpu.matmul %1, %71, %cst_70 {dimension_numbers = #tpu.dot_dimension_numbers<[1], [0], [0], [1], [0, 0, 1, 1], [], []>} : vector<8x32xbf16>, vector<32x8xbf16>, vector<8x8xf32> -> vector<8x8xf32>
    %c3_71 = arith.constant 3 : index
    %c0_72 = arith.constant 0 : index
    %c0_73 = arith.constant 0 : index
    %73 = vector.load %arg4[%c3_71, %c0_72, %c0_73] : memref<4x1x8xf32, #tpu.memory_space<vmem>>, vector<1x1x8xf32>
    %74 = vector.shape_cast %73 : vector<1x1x8xf32> to vector<1x8xf32>
    %75 = vector.broadcast %74 : vector<1x8xf32> to vector<8x8xf32>
    %76 = arith.addf %72, %75 : vector<8x8xf32>
    %c3_74 = arith.constant 3 : index
    %c0_75 = arith.constant 0 : index
    %c0_76 = arith.constant 0 : index
    %77 = vector.load %arg5[%c3_74, %c0_75, %c0_76] : memref<4x32x8xbf16, #tpu.memory_space<vmem>>, vector<1x32x8xbf16>
    %78 = vector.shape_cast %77 : vector<1x32x8xbf16> to vector<32x8xbf16>
    %cst_77 = arith.constant dense<0.000000e+00> : vector<8x8xf32>
    %79 = tpu.matmul %3, %78, %cst_77 {dimension_numbers = #tpu.dot_dimension_numbers<[1], [0], [0], [1], [0, 0, 1, 1], [], []>} : vector<8x32xbf16>, vector<32x8xbf16>, vector<8x8xf32> -> vector<8x8xf32>
    %c3_78 = arith.constant 3 : index
    %c0_79 = arith.constant 0 : index
    %c0_80 = arith.constant 0 : index
    %80 = vector.load %arg6[%c3_78, %c0_79, %c0_80] : memref<4x1x8xf32, #tpu.memory_space<vmem>>, vector<1x1x8xf32>
    %81 = vector.shape_cast %80 : vector<1x1x8xf32> to vector<1x8xf32>
    %82 = vector.broadcast %81 : vector<1x8xf32> to vector<8x8xf32>
    %83 = arith.addf %79, %82 : vector<8x8xf32>
    %84 = arith.truncf %76 : vector<8x8xf32> to vector<8x8xbf16>
    %c0_81 = arith.constant 0 : index
    %c3_82 = arith.constant 3 : index
    %c0_83 = arith.constant 0 : index
    %c0_84 = arith.constant 0 : index
    %85 = vector.load %arg7[%c0_81, %c3_82, %c0_83, %c0_84] : memref<1x4x8x8xbf16, #tpu.memory_space<vmem>>, vector<1x1x8x8xbf16>
    %86 = vector.shape_cast %85 : vector<1x1x8x8xbf16> to vector<8x8xbf16>
    %87 = vector.shape_cast %84 : vector<8x8xbf16> to vector<1x1x8x8xbf16>
    tpu.vector_store %arg7[%c0_81, %c3_82, %c0_83, %c0_84], %87 {strides = array<i32>} : memref<1x4x8x8xbf16, #tpu.memory_space<vmem>>, vector<1x1x8x8xbf16>,
    %88 = arith.truncf %83 : vector<8x8xf32> to vector<8x8xbf16>
    %c0_85 = arith.constant 0 : index
    %c3_86 = arith.constant 3 : index
    %c0_87 = arith.constant 0 : index
    %c0_88 = arith.constant 0 : index
    %89 = vector.load %arg8[%c0_85, %c3_86, %c0_87, %c0_88] : memref<1x4x8x8xbf16, #tpu.memory_space<vmem>>, vector<1x1x8x8xbf16>
    %90 = vector.shape_cast %89 : vector<1x1x8x8xbf16> to vector<8x8xbf16>
    %91 = vector.shape_cast %88 : vector<8x8xbf16> to vector<1x1x8x8xbf16>
    tpu.vector_store %arg8[%c0_85, %c3_86, %c0_87, %c0_88], %91 {strides = array<i32>} : memref<1x4x8x8xbf16, #tpu.memory_space<vmem>>, vector<1x1x8x8xbf16>,
    return
  }
  func.func @transform_0(%arg0: i32) -> (i32, i32, i32) {
    %c0_i32 = arith.constant 0 : i32
    %c0_i32_0 = arith.constant 0 : i32
    %c0_i32_1 = arith.constant 0 : i32
    return %arg0, %c0_i32, %c0_i32_0 : i32, i32, i32
  }
  func.func @transform_1(%arg0: i32) -> (i32, i32, i32) {
    %c0_i32 = arith.constant 0 : i32
    %c0_i32_0 = arith.constant 0 : i32
    %c0_i32_1 = arith.constant 0 : i32
    return %arg0, %c0_i32, %c0_i32_0 : i32, i32, i32
  }
  func.func @transform_2(%arg0: i32) -> (i32, i32, i32) {
    %c0_i32 = arith.constant 0 : i32
    %c0_i32_0 = arith.constant 0 : i32
    %c0_i32_1 = arith.constant 0 : i32
    %c0_i32_2 = arith.constant 0 : i32
    return %c0_i32, %c0_i32_0, %c0_i32_1 : i32, i32, i32
  }
  func.func @transform_3(%arg0: i32) -> (i32, i32, i32) {
    %c0_i32 = arith.constant 0 : i32
    %c0_i32_0 = arith.constant 0 : i32
    %c0_i32_1 = arith.constant 0 : i32
    %c0_i32_2 = arith.constant 0 : i32
    return %c0_i32, %c0_i32_0, %c0_i32_1 : i32, i32, i32
  }
  func.func @transform_4(%arg0: i32) -> (i32, i32, i32) {
    %c0_i32 = arith.constant 0 : i32
    %c0_i32_0 = arith.constant 0 : i32
    %c0_i32_1 = arith.constant 0 : i32
    %c0_i32_2 = arith.constant 0 : i32
    return %c0_i32, %c0_i32_0, %c0_i32_1 : i32, i32, i32
  }
  func.func @transform_5(%arg0: i32) -> (i32, i32, i32) {
    %c0_i32 = arith.constant 0 : i32
    %c0_i32_0 = arith.constant 0 : i32
    %c0_i32_1 = arith.constant 0 : i32
    %c0_i32_2 = arith.constant 0 : i32
    return %c0_i32, %c0_i32_0, %c0_i32_1 : i32, i32, i32
  }
  func.func @transform_6(%arg0: i32) -> (i32, i32, i32, i32) {
    %c0_i32 = arith.constant 0 : i32
    %c0_i32_0 = arith.constant 0 : i32
    %c0_i32_1 = arith.constant 0 : i32
    %c0_i32_2 = arith.constant 0 : i32
    return %arg0, %c0_i32, %c0_i32_0, %c0_i32_1 : i32, i32, i32, i32
  }
  func.func @transform_7(%arg0: i32) -> (i32, i32, i32, i32) {
    %c0_i32 = arith.constant 0 : i32
    %c0_i32_0 = arith.constant 0 : i32
    %c0_i32_1 = arith.constant 0 : i32
    %c0_i32_2 = arith.constant 0 : i32
    return %arg0, %c0_i32, %c0_i32_0, %c0_i32_1 : i32, i32, i32, i32
  }
}

module attributes {stable_mosaic.version = 11 : i64} {
  func.func @kv_proj_kernel(%arg0: i32, %arg1: memref<1x8x32xbf16, #tpu.memory_space<vmem>>, %arg2: memref<1x8x32xbf16, #tpu.memory_space<vmem>>, %arg3: memref<4x32x8xbf16, #tpu.memory_space<vmem>>, %arg4: memref<4x1x8xf32, #tpu.memory_space<vmem>>, %arg5: memref<4x32x8xbf16, #tpu.memory_space<vmem>>, %arg6: memref<4x1x8xf32, #tpu.memory_space<vmem>>, %arg7: memref<1x4x8x8xbf16, #tpu.memory_space<vmem>>, %arg8: memref<1x4x8x8xbf16, #tpu.memory_space<vmem>>) attributes {dimension_semantics = [#tpu.dimension_semantics<parallel>], iteration_bounds = array<i64: 2>, scalar_prefetch = 0 : i64, scratch_operands = 0 : i64, tpu.core_type = #tpu.core_type<tc>, window_params = [{transform_indices = @transform_0, window_bounds = array<i64: 1, 8, 32>}, {transform_indices = @transform_1, window_bounds = array<i64: 1, 8, 32>}, {pipeline_mode = #tpu.pipeline_mode<synchronous>, transform_indices = @transform_2, window_bounds = array<i64: 4, 32, 8>}, {pipeline_mode = #tpu.pipeline_mode<synchronous>, transform_indices = @transform_3, window_bounds = array<i64: 4, 1, 8>}, {pipeline_mode = #tpu.pipeline_mode<synchronous>, transform_indices = @transform_4, window_bounds = array<i64: 4, 32, 8>}, {pipeline_mode = #tpu.pipeline_mode<synchronous>, transform_indices = @transform_5, window_bounds = array<i64: 4, 1, 8>}, {transform_indices = @transform_6, window_bounds = array<i64: 1, 4, 8, 8>}, {transform_indices = @transform_7, window_bounds = array<i64: 1, 4, 8, 8>}]} {
    %c0 = arith.constant 0 : index
    %c0_0 = arith.constant 0 : index
    %c0_1 = arith.constant 0 : index
    %0 = vector.load %arg1[%c0, %c0_0, %c0_1] : memref<1x8x32xbf16, #tpu.memory_space<vmem>>, vector<1x8x32xbf16>
    %1 = vector.shape_cast %0 : vector<1x8x32xbf16> to vector<8x32xbf16>
    %c0_2 = arith.constant 0 : index
    %c0_3 = arith.constant 0 : index
    %c0_4 = arith.constant 0 : index
    %2 = vector.load %arg2[%c0_2, %c0_3, %c0_4] : memref<1x8x32xbf16, #tpu.memory_space<vmem>>, vector<1x8x32xbf16>
    %3 = vector.shape_cast %2 : vector<1x8x32xbf16> to vector<8x32xbf16>
    %c0_5 = arith.constant 0 : index
    %c0_6 = arith.constant 0 : index
    %c0_7 = arith.constant 0 : index
    %4 = vector.load %arg3[%c0_5, %c0_6, %c0_7] : memref<4x32x8xbf16, #tpu.memory_space<vmem>>, vector<1x32x8xbf16>
    %5 = vector.shape_cast %4 : vector<1x32x8xbf16> to vector<32x8xbf16>
    %cst = arith.constant dense<0.000000e+00> : vector<8x8xf32>
    %6 = tpu.matmul %1, %5, %cst {dimension_numbers = #tpu.dot_dimension_numbers<[1], [0], [0], [1], [0, 0, 1, 1], [], []>} : vector<8x32xbf16>, vector<32x8xbf16>, vector<8x8xf32> -> vector<8x8xf32>
    %c0_8 = arith.constant 0 : index
    %c0_9 = arith.constant 0 : index
    %c0_10 = arith.constant 0 : index
    %7 = vector.load %arg4[%c0_8, %c0_9, %c0_10] : memref<4x1x8xf32, #tpu.memory_space<vmem>>, vector<1x1x8xf32>
    %8 = vector.shape_cast %7 : vector<1x1x8xf32> to vector<1x8xf32>
    %9 = vector.broadcast %8 : vector<1x8xf32> to vector<8x8xf32>
    %10 = arith.addf %6, %9 : vector<8x8xf32>
    %c0_11 = arith.constant 0 : index
    %c0_12 = arith.constant 0 : index
    %c0_13 = arith.constant 0 : index
    %11 = vector.load %arg5[%c0_11, %c0_12, %c0_13] : memref<4x32x8xbf16, #tpu.memory_space<vmem>>, vector<1x32x8xbf16>
    %12 = vector.shape_cast %11 : vector<1x32x8xbf16> to vector<32x8xbf16>
    %cst_14 = arith.constant dense<0.000000e+00> : vector<8x8xf32>
    %13 = tpu.matmul %3, %12, %cst_14 {dimension_numbers = #tpu.dot_dimension_numbers<[1], [0], [0], [1], [0, 0, 1, 1], [], []>} : vector<8x32xbf16>, vector<32x8xbf16>, vector<8x8xf32> -> vector<8x8xf32>
    %c0_15 = arith.constant 0 : index
    %c0_16 = arith.constant 0 : index
    %c0_17 = arith.constant 0 : index
    %14 = vector.load %arg6[%c0_15, %c0_16, %c0_17] : memref<4x1x8xf32, #tpu.memory_space<vmem>>, vector<1x1x8xf32>
    %15 = vector.shape_cast %14 : vector<1x1x8xf32> to vector<1x8xf32>
    %16 = vector.broadcast %15 : vector<1x8xf32> to vector<8x8xf32>
    %17 = arith.addf %13, %16 : vector<8x8xf32>
    %18 = arith.truncf %10 : vector<8x8xf32> to vector<8x8xbf16>
    %c0_18 = arith.constant 0 : index
    %c0_19 = arith.constant 0 : index
    %c0_20 = arith.constant 0 : index
    %c0_21 = arith.constant 0 : index
    %19 = vector.load %arg7[%c0_18, %c0_19, %c0_20, %c0_21] : memref<1x4x8x8xbf16, #tpu.memory_space<vmem>>, vector<1x1x8x8xbf16>
    %20 = vector.shape_cast %19 : vector<1x1x8x8xbf16> to vector<8x8xbf16>
    %21 = vector.shape_cast %18 : vector<8x8xbf16> to vector<1x1x8x8xbf16>
    tpu.vector_store %arg7[%c0_18, %c0_19, %c0_20, %c0_21], %21 {strides = array<i32>} : memref<1x4x8x8xbf16, #tpu.memory_space<vmem>>, vector<1x1x8x8xbf16>,
    %22 = arith.truncf %17 : vector<8x8xf32> to vector<8x8xbf16>
    %c0_22 = arith.constant 0 : index
    %c0_23 = arith.constant 0 : index
    %c0_24 = arith.constant 0 : index
    %c0_25 = arith.constant 0 : index
    %23 = vector.load %arg8[%c0_22, %c0_23, %c0_24, %c0_25] : memref<1x4x8x8xbf16, #tpu.memory_space<vmem>>, vector<1x1x8x8xbf16>
    %24 = vector.shape_cast %23 : vector<1x1x8x8xbf16> to vector<8x8xbf16>
    %25 = vector.shape_cast %22 : vector<8x8xbf16> to vector<1x1x8x8xbf16>
    tpu.vector_store %arg8[%c0_22, %c0_23, %c0_24, %c0_25], %25 {strides = array<i32>} : memref<1x4x8x8xbf16, #tpu.memory_space<vmem>>, vector<1x1x8x8xbf16>,
    %c1 = arith.constant 1 : index
    %c0_26 = arith.constant 0 : index
    %c0_27 = arith.constant 0 : index
    %26 = vector.load %arg3[%c1, %c0_26, %c0_27] : memref<4x32x8xbf16, #tpu.memory_space<vmem>>, vector<1x32x8xbf16>
    %27 = vector.shape_cast %26 : vector<1x32x8xbf16> to vector<32x8xbf16>
    %cst_28 = arith.constant dense<0.000000e+00> : vector<8x8xf32>
    %28 = tpu.matmul %1, %27, %cst_28 {dimension_numbers = #tpu.dot_dimension_numbers<[1], [0], [0], [1], [0, 0, 1, 1], [], []>} : vector<8x32xbf16>, vector<32x8xbf16>, vector<8x8xf32> -> vector<8x8xf32>
    %c1_29 = arith.constant 1 : index
    %c0_30 = arith.constant 0 : index
    %c0_31 = arith.constant 0 : index
    %29 = vector.load %arg4[%c1_29, %c0_30, %c0_31] : memref<4x1x8xf32, #tpu.memory_space<vmem>>, vector<1x1x8xf32>
    %30 = vector.shape_cast %29 : vector<1x1x8xf32> to vector<1x8xf32>
    %31 = vector.broadcast %30 : vector<1x8xf32> to vector<8x8xf32>
    %32 = arith.addf %28, %31 : vector<8x8xf32>
    %c1_32 = arith.constant 1 : index
    %c0_33 = arith.constant 0 : index
    %c0_34 = arith.constant 0 : index
    %33 = vector.load %arg5[%c1_32, %c0_33, %c0_34] : memref<4x32x8xbf16, #tpu.memory_space<vmem>>, vector<1x32x8xbf16>
    %34 = vector.shape_cast %33 : vector<1x32x8xbf16> to vector<32x8xbf16>
    %cst_35 = arith.constant dense<0.000000e+00> : vector<8x8xf32>
    %35 = tpu.matmul %3, %34, %cst_35 {dimension_numbers = #tpu.dot_dimension_numbers<[1], [0], [0], [1], [0, 0, 1, 1], [], []>} : vector<8x32xbf16>, vector<32x8xbf16>, vector<8x8xf32> -> vector<8x8xf32>
    %c1_36 = arith.constant 1 : index
    %c0_37 = arith.constant 0 : index
    %c0_38 = arith.constant 0 : index
    %36 = vector.load %arg6[%c1_36, %c0_37, %c0_38] : memref<4x1x8xf32, #tpu.memory_space<vmem>>, vector<1x1x8xf32>
    %37 = vector.shape_cast %36 : vector<1x1x8xf32> to vector<1x8xf32>
    %38 = vector.broadcast %37 : vector<1x8xf32> to vector<8x8xf32>
    %39 = arith.addf %35, %38 : vector<8x8xf32>
    %40 = arith.truncf %32 : vector<8x8xf32> to vector<8x8xbf16>
    %c0_39 = arith.constant 0 : index
    %c1_40 = arith.constant 1 : index
    %c0_41 = arith.constant 0 : index
    %c0_42 = arith.constant 0 : index
    %41 = vector.load %arg7[%c0_39, %c1_40, %c0_41, %c0_42] : memref<1x4x8x8xbf16, #tpu.memory_space<vmem>>, vector<1x1x8x8xbf16>
    %42 = vector.shape_cast %41 : vector<1x1x8x8xbf16> to vector<8x8xbf16>
    %43 = vector.shape_cast %40 : vector<8x8xbf16> to vector<1x1x8x8xbf16>
    tpu.vector_store %arg7[%c0_39, %c1_40, %c0_41, %c0_42], %43 {strides = array<i32>} : memref<1x4x8x8xbf16, #tpu.memory_space<vmem>>, vector<1x1x8x8xbf16>,
    %44 = arith.truncf %39 : vector<8x8xf32> to vector<8x8xbf16>
    %c0_43 = arith.constant 0 : index
    %c1_44 = arith.constant 1 : index
    %c0_45 = arith.constant 0 : index
    %c0_46 = arith.constant 0 : index
    %45 = vector.load %arg8[%c0_43, %c1_44, %c0_45, %c0_46] : memref<1x4x8x8xbf16, #tpu.memory_space<vmem>>, vector<1x1x8x8xbf16>
    %46 = vector.shape_cast %45 : vector<1x1x8x8xbf16> to vector<8x8xbf16>
    %47 = vector.shape_cast %44 : vector<8x8xbf16> to vector<1x1x8x8xbf16>
    tpu.vector_store %arg8[%c0_43, %c1_44, %c0_45, %c0_46], %47 {strides = array<i32>} : memref<1x4x8x8xbf16, #tpu.memory_space<vmem>>, vector<1x1x8x8xbf16>,
    %c2 = arith.constant 2 : index
    %c0_47 = arith.constant 0 : index
    %c0_48 = arith.constant 0 : index
    %48 = vector.load %arg3[%c2, %c0_47, %c0_48] : memref<4x32x8xbf16, #tpu.memory_space<vmem>>, vector<1x32x8xbf16>
    %49 = vector.shape_cast %48 : vector<1x32x8xbf16> to vector<32x8xbf16>
    %cst_49 = arith.constant dense<0.000000e+00> : vector<8x8xf32>
    %50 = tpu.matmul %1, %49, %cst_49 {dimension_numbers = #tpu.dot_dimension_numbers<[1], [0], [0], [1], [0, 0, 1, 1], [], []>} : vector<8x32xbf16>, vector<32x8xbf16>, vector<8x8xf32> -> vector<8x8xf32>
    %c2_50 = arith.constant 2 : index
    %c0_51 = arith.constant 0 : index
    %c0_52 = arith.constant 0 : index
    %51 = vector.load %arg4[%c2_50, %c0_51, %c0_52] : memref<4x1x8xf32, #tpu.memory_space<vmem>>, vector<1x1x8xf32>
    %52 = vector.shape_cast %51 : vector<1x1x8xf32> to vector<1x8xf32>
    %53 = vector.broadcast %52 : vector<1x8xf32> to vector<8x8xf32>
    %54 = arith.addf %50, %53 : vector<8x8xf32>
    %c2_53 = arith.constant 2 : index
    %c0_54 = arith.constant 0 : index
    %c0_55 = arith.constant 0 : index
    %55 = vector.load %arg5[%c2_53, %c0_54, %c0_55] : memref<4x32x8xbf16, #tpu.memory_space<vmem>>, vector<1x32x8xbf16>
    %56 = vector.shape_cast %55 : vector<1x32x8xbf16> to vector<32x8xbf16>
    %cst_56 = arith.constant dense<0.000000e+00> : vector<8x8xf32>
    %57 = tpu.matmul %3, %56, %cst_56 {dimension_numbers = #tpu.dot_dimension_numbers<[1], [0], [0], [1], [0, 0, 1, 1], [], []>} : vector<8x32xbf16>, vector<32x8xbf16>, vector<8x8xf32> -> vector<8x8xf32>
    %c2_57 = arith.constant 2 : index
    %c0_58 = arith.constant 0 : index
    %c0_59 = arith.constant 0 : index
    %58 = vector.load %arg6[%c2_57, %c0_58, %c0_59] : memref<4x1x8xf32, #tpu.memory_space<vmem>>, vector<1x1x8xf32>
    %59 = vector.shape_cast %58 : vector<1x1x8xf32> to vector<1x8xf32>
    %60 = vector.broadcast %59 : vector<1x8xf32> to vector<8x8xf32>
    %61 = arith.addf %57, %60 : vector<8x8xf32>
    %62 = arith.truncf %54 : vector<8x8xf32> to vector<8x8xbf16>
    %c0_60 = arith.constant 0 : index
    %c2_61 = arith.constant 2 : index
    %c0_62 = arith.constant 0 : index
    %c0_63 = arith.constant 0 : index
    %63 = vector.load %arg7[%c0_60, %c2_61, %c0_62, %c0_63] : memref<1x4x8x8xbf16, #tpu.memory_space<vmem>>, vector<1x1x8x8xbf16>
    %64 = vector.shape_cast %63 : vector<1x1x8x8xbf16> to vector<8x8xbf16>
    %65 = vector.shape_cast %62 : vector<8x8xbf16> to vector<1x1x8x8xbf16>
    tpu.vector_store %arg7[%c0_60, %c2_61, %c0_62, %c0_63], %65 {strides = array<i32>} : memref<1x4x8x8xbf16, #tpu.memory_space<vmem>>, vector<1x1x8x8xbf16>,
    %66 = arith.truncf %61 : vector<8x8xf32> to vector<8x8xbf16>
    %c0_64 = arith.constant 0 : index
    %c2_65 = arith.constant 2 : index
    %c0_66 = arith.constant 0 : index
    %c0_67 = arith.constant 0 : index
    %67 = vector.load %arg8[%c0_64, %c2_65, %c0_66, %c0_67] : memref<1x4x8x8xbf16, #tpu.memory_space<vmem>>, vector<1x1x8x8xbf16>
    %68 = vector.shape_cast %67 : vector<1x1x8x8xbf16> to vector<8x8xbf16>
    %69 = vector.shape_cast %66 : vector<8x8xbf16> to vector<1x1x8x8xbf16>
    tpu.vector_store %arg8[%c0_64, %c2_65, %c0_66, %c0_67], %69 {strides = array<i32>} : memref<1x4x8x8xbf16, #tpu.memory_space<vmem>>, vector<1x1x8x8xbf16>,
    %c3 = arith.constant 3 : index
    %c0_68 = arith.constant 0 : index
    %c0_69 = arith.constant 0 : index
    %70 = vector.load %arg3[%c3, %c0_68, %c0_69] : memref<4x32x8xbf16, #tpu.memory_space<vmem>>, vector<1x32x8xbf16>
    %71 = vector.shape_cast %70 : vector<1x32x8xbf16> to vector<32x8xbf16>
    %cst_70 = arith.constant dense<0.000000e+00> : vector<8x8xf32>
    %72 = tpu.matmul %1, %71, %cst_70 {dimension_numbers = #tpu.dot_dimension_numbers<[1], [0], [0], [1], [0, 0, 1, 1], [], []>} : vector<8x32xbf16>, vector<32x8xbf16>, vector<8x8xf32> -> vector<8x8xf32>
    %c3_71 = arith.constant 3 : index
    %c0_72 = arith.constant 0 : index
    %c0_73 = arith.constant 0 : index
    %73 = vector.load %arg4[%c3_71, %c0_72, %c0_73] : memref<4x1x8xf32, #tpu.memory_space<vmem>>, vector<1x1x8xf32>
    %74 = vector.shape_cast %73 : vector<1x1x8xf32> to vector<1x8xf32>
    %75 = vector.broadcast %74 : vector<1x8xf32> to vector<8x8xf32>
    %76 = arith.addf %72, %75 : vector<8x8xf32>
    %c3_74 = arith.constant 3 : index
    %c0_75 = arith.constant 0 : index
    %c0_76 = arith.constant 0 : index
    %77 = vector.load %arg5[%c3_74, %c0_75, %c0_76] : memref<4x32x8xbf16, #tpu.memory_space<vmem>>, vector<1x32x8xbf16>
    %78 = vector.shape_cast %77 : vector<1x32x8xbf16> to vector<32x8xbf16>
    %cst_77 = arith.constant dense<0.000000e+00> : vector<8x8xf32>
    %79 = tpu.matmul %3, %78, %cst_77 {dimension_numbers = #tpu.dot_dimension_numbers<[1], [0], [0], [1], [0, 0, 1, 1], [], []>} : vector<8x32xbf16>, vector<32x8xbf16>, vector<8x8xf32> -> vector<8x8xf32>
    %c3_78 = arith.constant 3 : index
    %c0_79 = arith.constant 0 : index
    %c0_80 = arith.constant 0 : index
    %80 = vector.load %arg6[%c3_78, %c0_79, %c0_80] : memref<4x1x8xf32, #tpu.memory_space<vmem>>, vector<1x1x8xf32>
    %81 = vector.shape_cast %80 : vector<1x1x8xf32> to vector<1x8xf32>
    %82 = vector.broadcast %81 : vector<1x8xf32> to vector<8x8xf32>
    %83 = arith.addf %79, %82 : vector<8x8xf32>
    %84 = arith.truncf %76 : vector<8x8xf32> to vector<8x8xbf16>
    %c0_81 = arith.constant 0 : index
    %c3_82 = arith.constant 3 : index
    %c0_83 = arith.constant 0 : index
    %c0_84 = arith.constant 0 : index
    %85 = vector.load %arg7[%c0_81, %c3_82, %c0_83, %c0_84] : memref<1x4x8x8xbf16, #tpu.memory_space<vmem>>, vector<1x1x8x8xbf16>
    %86 = vector.shape_cast %85 : vector<1x1x8x8xbf16> to vector<8x8xbf16>
    %87 = vector.shape_cast %84 : vector<8x8xbf16> to vector<1x1x8x8xbf16>
    tpu.vector_store %arg7[%c0_81, %c3_82, %c0_83, %c0_84], %87 {strides = array<i32>} : memref<1x4x8x8xbf16, #tpu.memory_space<vmem>>, vector<1x1x8x8xbf16>,
    %88 = arith.truncf %83 : vector<8x8xf32> to vector<8x8xbf16>
    %c0_85 = arith.constant 0 : index
    %c3_86 = arith.constant 3 : index
    %c0_87 = arith.constant 0 : index
    %c0_88 = arith.constant 0 : index
    %89 = vector.load %arg8[%c0_85, %c3_86, %c0_87, %c0_88] : memref<1x4x8x8xbf16, #tpu.memory_space<vmem>>, vector<1x1x8x8xbf16>
    %90 = vector.shape_cast %89 : vector<1x1x8x8xbf16> to vector<8x8xbf16>
    %91 = vector.shape_cast %88 : vector<8x8xbf16> to vector<1x1x8x8xbf16>
    tpu.vector_store %arg8[%c0_85, %c3_86, %c0_87, %c0_88], %91 {strides = array<i32>} : memref<1x4x8x8xbf16, #tpu.memory_space<vmem>>, vector<1x1x8x8xbf16>,
    return
  }
  func.func @transform_0(%arg0: i32) -> (i32, i32, i32) {
    %c0_i32 = arith.constant 0 : i32
    %c0_i32_0 = arith.constant 0 : i32
    %c0_i32_1 = arith.constant 0 : i32
    return %arg0, %c0_i32, %c0_i32_0 : i32, i32, i32
  }
  func.func @transform_1(%arg0: i32) -> (i32, i32, i32) {
    %c0_i32 = arith.constant 0 : i32
    %c0_i32_0 = arith.constant 0 : i32
    %c0_i32_1 = arith.constant 0 : i32
    return %arg0, %c0_i32, %c0_i32_0 : i32, i32, i32
  }
  func.func @transform_2(%arg0: i32) -> (i32, i32, i32) {
    %c0_i32 = arith.constant 0 : i32
    %c0_i32_0 = arith.constant 0 : i32
    %c0_i32_1 = arith.constant 0 : i32
    %c0_i32_2 = arith.constant 0 : i32
    return %c0_i32, %c0_i32_0, %c0_i32_1 : i32, i32, i32
  }
  func.func @transform_3(%arg0: i32) -> (i32, i32, i32) {
    %c0_i32 = arith.constant 0 : i32
    %c0_i32_0 = arith.constant 0 : i32
    %c0_i32_1 = arith.constant 0 : i32
    %c0_i32_2 = arith.constant 0 : i32
    return %c0_i32, %c0_i32_0, %c0_i32_1 : i32, i32, i32
  }
  func.func @transform_4(%arg0: i32) -> (i32, i32, i32) {
    %c0_i32 = arith.constant 0 : i32
    %c0_i32_0 = arith.constant 0 : i32
    %c0_i32_1 = arith.constant 0 : i32
    %c0_i32_2 = arith.constant 0 : i32
    return %c0_i32, %c0_i32_0, %c0_i32_1 : i32, i32, i32
  }
  func.func @transform_5(%arg0: i32) -> (i32, i32, i32) {
    %c0_i32 = arith.constant 0 : i32
    %c0_i32_0 = arith.constant 0 : i32
    %c0_i32_1 = arith.constant 0 : i32
    %c0_i32_2 = arith.constant 0 : i32
    return %c0_i32, %c0_i32_0, %c0_i32_1 : i32, i32, i32
  }
  func.func @transform_6(%arg0: i32) -> (i32, i32, i32, i32) {
    %c0_i32 = arith.constant 0 : i32
    %c0_i32_0 = arith.constant 0 : i32
    %c0_i32_1 = arith.constant 0 : i32
    %c0_i32_2 = arith.constant 0 : i32
    return %arg0, %c0_i32, %c0_i32_0, %c0_i32_1 : i32, i32, i32, i32
  }
  func.func @transform_7(%arg0: i32) -> (i32, i32, i32, i32) {
    %c0_i32 = arith.constant 0 : i32
    %c0_i32_0 = arith.constant 0 : i32
    %c0_i32_1 = arith.constant 0 : i32
    %c0_i32_2 = arith.constant 0 : i32
    return %arg0, %c0_i32, %c0_i32_0, %c0_i32_1 : i32, i32, i32, i32
  }
}

</mosaic_0001>

<llo_original>
// kernel: tpu_custom_call.1
$region0: #{tpu_custom_call.1}
  #allocation0 [shape = 'u32[]', space=smem, size = 0x4, offset = 0x4, fixed_abs, tag = 'smem constant byte address 0x4 - core index']
  #allocation1 [shape = 'u32[72,128]{1,0:T(1,128)}', space=vmem, size = 0x9000, scoped, tag = 'internal scratch']
  %s0 = inlined_call_operand.vmem [shape: bf16[2,8,32], index: 0, kind: input, shape index: {}]
  %s1 = inlined_call_operand.vmem [shape: bf16[2,8,32], index: 1, kind: input, shape index: {}]
  %s2 = inlined_call_operand.vmem [shape: bf16[4,32,8], index: 2, kind: input, shape index: {}]
  %s3 = inlined_call_operand.vmem [shape: f32[4,1,8], index: 3, kind: input, shape index: {}]
  %s4 = inlined_call_operand.vmem [shape: bf16[4,32,8], index: 4, kind: input, shape index: {}]
  %s5 = inlined_call_operand.vmem [shape: f32[4,1,8], index: 5, kind: input, shape index: {}]
  %s6 = inlined_call_operand.hbm [shape: bf16[2,4,8,8], index: 6, kind: output, shape index: {0}]
  %s7 = inlined_call_operand.hbm [shape: bf16[2,4,8,8], index: 7, kind: output, shape index: {1}]
  %8 = xla_tuple %s6, %s7
  %s9 = sld [smem:[#allocation0]]
  $region65: #{tpu_custom_call.1} parent=0
    _
  %s11 = ssub.s32 1, %s9
  %s12 = scalar_select 0, %s11, %s9
  $region1: #{tpu_custom_call.1} parent=0
    #allocation2 [shape = 'u8[16384]{0}', space=vmem, size = 0x4000, scoped, tag = 'output window, operand 0']
    #allocation3 [shape = 's32[2]{0}', space=sflag, size = 0x8, scoped, tag = 'scoped memory for tpu_custom_call.1']
    #allocation4 [shape = 'u8[16384]{0}', space=vmem, size = 0x4000, scoped, tag = 'output window, operand 1']
    #allocation5 [shape = 's32[2]{0}', space=sflag, size = 0x8, scoped, tag = 'scoped memory for tpu_custom_call.1']
    %13 = vsyncpa [#allocation3], 0
    %s14 = scalar_lea.sflag [#allocation3], 1
    %15 = vsyncpa %s14, 0
    %16 = vsyncpa [#allocation5], 0
    %s17 = scalar_lea.sflag [#allocation5], 1
    %18 = vsyncpa %s17, 0
    loop: start=0, step=1, limit=4
    $region2: #{tpu_custom_call.1} parent=1 // loop_pre_header
      _
    $region3: #{tpu_custom_call.1} parent=1 // loop_header
      %s20 = sphi 0, %s24
      %p21 = scmp.ge.s32.totalorder %s20, 4
      %s30 = sphi 0, %s32
      %s33 = sphi 0, %s30
      %s34 = sphi 0, %s33
      %s50 = sphi 0, %s34
      %s56 = sphi 0, %s58
      %s59 = sphi 0, %s56
      %s60 = sphi 0, %s59
      %s76 = sphi 0, %s60
      %s80 = sphi 0, %s80
      %s82 = sphi 0, %s80
      %s83 = sphi 0, %s82
      %s97 = sphi 0, %s83
      %s101 = sphi 0, %s101
      %s103 = sphi 0, %s101
      %s104 = sphi 0, %s103
      %s118 = sphi 0, %s104
      %s122 = sphi 0, %s122
      %s124 = sphi 0, %s122
      %s125 = sphi 0, %s124
      %s139 = sphi 0, %s125
      %s143 = sphi 0, %s143
      %s145 = sphi 0, %s143
      %s146 = sphi 0, %s145
      %s160 = sphi 0, %s146
      %s166 = sphi 0, %s168
      %s169 = sphi 0, %s166
      %s170 = sphi 0, %s169
      %s186 = sphi 0, %s170
      %s192 = sphi 0, %s194
      %s195 = sphi 0, %s192
      %s196 = sphi 0, %s195
      %s212 = sphi 0, %s196
    $region4: #{tpu_custom_call.1} parent=1 // loop_header_branch
      %23 = sbr.rel (%p21) target = $region8
    $region5: #{tpu_custom_call.1} parent=1 // loop_body
      %s25 = ssub.s32 %s20, 1
      %s26 = ssub.s32 %s20, 2
      %s27 = sadd.s32 %s20, 1
      %s28 = ssub.s32 %s20, %s27
      %p29 = scmp.eq.s32.totalorder %s28, 0
      %s31 = sadd.s32 %s30, 1
      %s32 = scalar_select %p29, %s30, %s31
      %p35 = pneg %p29
      %p36 = scmp.eq.s32.totalorder %s20, 1
      %p37 = por %p35, %p36
      %p38 = scmp.ne.s32.totalorder %s30, %s33
      %p39 = scmp.eq.s32.totalorder %s20, 0
      %p40 = por %p38, %p39
      %p41 = scmp.ne.s32.totalorder %s30, %s33
      %p42 = scmp.eq.s32.totalorder %s25, 1
      %p43 = por %p41, %p42
      %p44 = scmp.ne.s32.totalorder %s33, %s34
      %p45 = scmp.eq.s32.totalorder %s25, 0
      %p46 = por %p44, %p45
      %p47 = scmp.ne.s32.totalorder %s33, %s34
      %p48 = scmp.eq.s32.totalorder %s26, 1
      %p49 = por %p47, %p48
      %p51 = scmp.ne.s32.totalorder %s34, %s50
      %p52 = scmp.eq.s32.totalorder %s26, 0
      %p53 = por %p51, %p52
      %s54 = ssub.s32 %s20, %s27
      %p55 = scmp.eq.s32.totalorder %s54, 0
      %s57 = sadd.s32 %s56, 1
      %s58 = scalar_select %p55, %s56, %s57
      %p61 = pneg %p55
      %p62 = scmp.eq.s32.totalorder %s20, 1
      %p63 = por %p61, %p62
      %p64 = scmp.ne.s32.totalorder %s56, %s59
      %p65 = scmp.eq.s32.totalorder %s20, 0
      %p66 = por %p64, %p65
      %p67 = scmp.ne.s32.totalorder %s56, %s59
      %p68 = scmp.eq.s32.totalorder %s25, 1
      %p69 = por %p67, %p68
      %p70 = scmp.ne.s32.totalorder %s59, %s60
      %p71 = scmp.eq.s32.totalorder %s25, 0
      %p72 = por %p70, %p71
      %p73 = scmp.ne.s32.totalorder %s59, %s60
      %p74 = scmp.eq.s32.totalorder %s26, 1
      %p75 = por %p73, %p74
      %p77 = scmp.ne.s32.totalorder %s60, %s76
      %p78 = scmp.eq.s32.totalorder %s26, 0
      %p79 = por %p77, %p78
      %s81 = sadd.s32 %s80, 1
      %p84 = scmp.eq.s32.totalorder %s20, 1
      %p85 = scmp.ne.s32.totalorder %s80, %s82
      %p86 = scmp.eq.s32.totalorder %s20, 0
      %p87 = por %p85, %p86
      %p88 = scmp.ne.s32.totalorder %s80, %s82
      %p89 = scmp.eq.s32.totalorder %s25, 1
      %p90 = por %p88, %p89
      %p91 = scmp.ne.s32.totalorder %s82, %s83
      %p92 = scmp.eq.s32.totalorder %s25, 0
      %p93 = por %p91, %p92
      %p94 = scmp.ne.s32.totalorder %s82, %s83
      %p95 = scmp.eq.s32.totalorder %s26, 1
      %p96 = por %p94, %p95
      %p98 = scmp.ne.s32.totalorder %s83, %s97
      %p99 = scmp.eq.s32.totalorder %s26, 0
      %p100 = por %p98, %p99
      %s102 = sadd.s32 %s101, 1
      %p105 = scmp.eq.s32.totalorder %s20, 1
      %p106 = scmp.ne.s32.totalorder %s101, %s103
      %p107 = scmp.eq.s32.totalorder %s20, 0
      %p108 = por %p106, %p107
      %p109 = scmp.ne.s32.totalorder %s101, %s103
      %p110 = scmp.eq.s32.totalorder %s25, 1
      %p111 = por %p109, %p110
      %p112 = scmp.ne.s32.totalorder %s103, %s104
      %p113 = scmp.eq.s32.totalorder %s25, 0
      %p114 = por %p112, %p113
      %p115 = scmp.ne.s32.totalorder %s103, %s104
      %p116 = scmp.eq.s32.totalorder %s26, 1
      %p117 = por %p115, %p116
      %p119 = scmp.ne.s32.totalorder %s104, %s118
      %p120 = scmp.eq.s32.totalorder %s26, 0
      %p121 = por %p119, %p120
      %s123 = sadd.s32 %s122, 1
      %p126 = scmp.eq.s32.totalorder %s20, 1
      %p127 = scmp.ne.s32.totalorder %s122, %s124
      %p128 = scmp.eq.s32.totalorder %s20, 0
      %p129 = por %p127, %p128
      %p130 = scmp.ne.s32.totalorder %s122, %s124
      %p131 = scmp.eq.s32.totalorder %s25, 1
      %p132 = por %p130, %p131
      %p133 = scmp.ne.s32.totalorder %s124, %s125
      %p134 = scmp.eq.s32.totalorder %s25, 0
      %p135 = por %p133, %p134
      %p136 = scmp.ne.s32.totalorder %s124, %s125
      %p137 = scmp.eq.s32.totalorder %s26, 1
      %p138 = por %p136, %p137
      %p140 = scmp.ne.s32.totalorder %s125, %s139
      %p141 = scmp.eq.s32.totalorder %s26, 0
      %p142 = por %p140, %p141
      %s144 = sadd.s32 %s143, 1
      %p147 = scmp.eq.s32.totalorder %s20, 1
      %p148 = scmp.ne.s32.totalorder %s143, %s145
      %p149 = scmp.eq.s32.totalorder %s20, 0
      %p150 = por %p148, %p149
      %p151 = scmp.ne.s32.totalorder %s143, %s145
      %p152 = scmp.eq.s32.totalorder %s25, 1
      %p153 = por %p151, %p152
      %p154 = scmp.ne.s32.totalorder %s145, %s146
      %p155 = scmp.eq.s32.totalorder %s25, 0
      %p156 = por %p154, %p155
      %p157 = scmp.ne.s32.totalorder %s145, %s146
      %p158 = scmp.eq.s32.totalorder %s26, 1
      %p159 = por %p157, %p158
      %p161 = scmp.ne.s32.totalorder %s146, %s160
      %p162 = scmp.eq.s32.totalorder %s26, 0
      %p163 = por %p161, %p162
      %s164 = ssub.s32 %s20, %s27
      %p165 = scmp.eq.s32.totalorder %s164, 0
      %s167 = sadd.s32 %s166, 1
      %s168 = scalar_select %p165, %s166, %s167
      %p171 = pneg %p165
      %p172 = scmp.eq.s32.totalorder %s20, 1
      %p173 = por %p171, %p172
      %p174 = scmp.ne.s32.totalorder %s166, %s169
      %p175 = scmp.eq.s32.totalorder %s20, 0
      %p176 = por %p174, %p175
      %p177 = scmp.ne.s32.totalorder %s166, %s169
      %p178 = scmp.eq.s32.totalorder %s25, 1
      %p179 = por %p177, %p178
      %p180 = scmp.ne.s32.totalorder %s169, %s170
      %p181 = scmp.eq.s32.totalorder %s25, 0
      %p182 = por %p180, %p181
      %p183 = scmp.ne.s32.totalorder %s169, %s170
      %p184 = scmp.eq.s32.totalorder %s26, 1
      %p185 = por %p183, %p184
      %p187 = scmp.ne.s32.totalorder %s170, %s186
      %p188 = scmp.eq.s32.totalorder %s26, 0
      %p189 = por %p187, %p188
      %s190 = ssub.s32 %s20, %s27
      %p191 = scmp.eq.s32.totalorder %s190, 0
      %s193 = sadd.s32 %s192, 1
      %s194 = scalar_select %p191, %s192, %s193
      %p197 = pneg %p191
      %p198 = scmp.eq.s32.totalorder %s20, 1
      %p199 = por %p197, %p198
      %p200 = scmp.ne.s32.totalorder %s192, %s195
      %p201 = scmp.eq.s32.totalorder %s20, 0
      %p202 = por %p200, %p201
      %p203 = scmp.ne.s32.totalorder %s192, %s195
      %p204 = scmp.eq.s32.totalorder %s25, 1
      %p205 = por %p203, %p204
      %p206 = scmp.ne.s32.totalorder %s195, %s196
      %p207 = scmp.eq.s32.totalorder %s25, 0
      %p208 = por %p206, %p207
      %p209 = scmp.ne.s32.totalorder %s195, %s196
      %p210 = scmp.eq.s32.totalorder %s26, 1
      %p211 = por %p209, %p210
      %p213 = scmp.ne.s32.totalorder %s196, %s212
      %p214 = scmp.eq.s32.totalorder %s26, 0
      %p215 = por %p213, %p214
      %p216 = scmp.le.s32.totalorder 1, %s20
      %p217 = scmp.lt.s32.totalorder %s20, 3
      %p218 = pnand %p216, %p217
      %p219 = pneg %p218
      // Predicated region
      $region9: #{tpu_custom_call.1} parent=5 // pred_check
        _
      $region10: #{tpu_custom_call.1} parent=5 // pred_check_branch
        %221 = sbr.rel (%p218) target = $region12
      $region11: #{tpu_custom_call.1} parent=5 // pred_region
        %s222 = ssub.s32 %s20, 1
        // Predicated region
        $region13: #{tpu_custom_call.1} parent=11 // pred_check
          %p223 = pneg %p93
        $region14: #{tpu_custom_call.1} parent=11 // pred_check_branch
          %225 = sbr.rel (%p223) target = $region16
        $region15: #{tpu_custom_call.1} parent=11 // pred_region
          _
        $region16: #{tpu_custom_call.1} parent=11 // pred_fallthru
          _
        // Predicated region
        $region17: #{tpu_custom_call.1} parent=11 // pred_check
          %p226 = pneg %p114
        $region18: #{tpu_custom_call.1} parent=11 // pred_check_branch
          %228 = sbr.rel (%p226) target = $region20
        $region19: #{tpu_custom_call.1} parent=11 // pred_region
          _
        $region20: #{tpu_custom_call.1} parent=11 // pred_fallthru
          _
        // Predicated region
        $region21: #{tpu_custom_call.1} parent=11 // pred_check
          %p229 = pneg %p135
        $region22: #{tpu_custom_call.1} parent=11 // pred_check_branch
          %231 = sbr.rel (%p229) target = $region24
        $region23: #{tpu_custom_call.1} parent=11 // pred_region
          _
        $region24: #{tpu_custom_call.1} parent=11 // pred_fallthru
          _
        // Predicated region
        $region25: #{tpu_custom_call.1} parent=11 // pred_check
          %p232 = pneg %p156
        $region26: #{tpu_custom_call.1} parent=11 // pred_check_branch
          %234 = sbr.rel (%p232) target = $region28
        $region27: #{tpu_custom_call.1} parent=11 // pred_region
          _
        $region28: #{tpu_custom_call.1} parent=11 // pred_fallthru
          _
      $region12: #{tpu_custom_call.1} parent=5 // pred_fallthru
        _
      %p235 = scmp.lt.s32.totalorder %s20, 2
      // Predicated region
      $region29: #{tpu_custom_call.1} parent=5 // pred_check
        %p236 = pneg %p235
      $region30: #{tpu_custom_call.1} parent=5 // pred_check_branch
        %238 = sbr.rel (%p236) target = $region32
      $region31: #{tpu_custom_call.1} parent=5 // pred_region
        // Predicated region
        $region33: #{tpu_custom_call.1} parent=31 // pred_check
          %p239 = pneg %p40
        $region34: #{tpu_custom_call.1} parent=31 // pred_check_branch
          %241 = sbr.rel (%p239) target = $region36
        $region35: #{tpu_custom_call.1} parent=31 // pred_region
          %p242 = scmp.lt.s32.totalorder %s20, 1
          %s243 = scalar_select %p242, %s20, 1
          %s244 = smul.addr %s243, 4
          %s245 = scalar_lea.vmem %s0, %s244
        $region36: #{tpu_custom_call.1} parent=31 // pred_fallthru
          _
        // Predicated region
        $region37: #{tpu_custom_call.1} parent=31 // pred_check
          %p246 = pneg %p66
        $region38: #{tpu_custom_call.1} parent=31 // pred_check_branch
          %248 = sbr.rel (%p246) target = $region40
        $region39: #{tpu_custom_call.1} parent=31 // pred_region
          %p249 = scmp.lt.s32.totalorder %s20, 1
          %s250 = scalar_select %p249, %s20, 1
          %s251 = smul.addr %s250, 4
          %s252 = scalar_lea.vmem %s1, %s251
        $region40: #{tpu_custom_call.1} parent=31 // pred_fallthru
          _
      $region32: #{tpu_custom_call.1} parent=5 // pred_fallthru
        _
      %p253 = scmp.le.s32.totalorder 1, %s20
      %p254 = scmp.lt.s32.totalorder %s20, 3
      %p255 = pnand %p253, %p254
      %p256 = pneg %p255
      // Predicated region
      $region41: #{tpu_custom_call.1} parent=5 // pred_check
        _
      $region42: #{tpu_custom_call.1} parent=5 // pred_check_branch
        %258 = sbr.rel (%p255) target = $region44
      $region43: #{tpu_custom_call.1} parent=5 // pred_region
        %s259 = ssub.s32 %s20, 1
        %p260 = scmp.lt.s32.totalorder %s25, 1
        %s261 = scalar_select %p260, %s25, 1
        %s262 = smul.addr %s261, 4
        %s263 = scalar_lea.vmem %s0, %s262
        %p264 = pneg %p46
        %p265 = pneg %p43
        %p266 = scmp.lt.s32.totalorder %s25, 1
        %s267 = scalar_select %p266, %s25, 1
        %s268 = smul.addr %s267, 4
        %s269 = scalar_lea.vmem %s1, %s268
        %p270 = pneg %p72
        %p271 = pneg %p69
        %p272 = pneg %p93
        %p273 = pneg %p90
        %p274 = pneg %p114
        %p275 = pneg %p111
        %p276 = pneg %p135
        %p277 = pneg %p132
        %p278 = pneg %p156
        %p279 = pneg %p153
        %p280 = pneg %p182
        %p281 = pneg %p179
        %s282 = sand.u32 %s169, 1
        %s283 = scalar_lea.sflag [#allocation3], %s282
        %s284 = sand.u32 %s169, 1
        %s285 = smul.addr %s284, 16
        %s286 = scalar_lea.vmem [#allocation2], %s285
        %p287 = pneg %p208
        %p288 = pneg %p205
        %s289 = sand.u32 %s195, 1
        %s290 = scalar_lea.sflag [#allocation5], %s289
        %s291 = sand.u32 %s195, 1
        %s292 = smul.addr %s291, 16
        %s293 = scalar_lea.vmem [#allocation4], %s292
        %p294 = scmp.lt.s32.totalorder %s25, 1
        %s295 = scalar_select %p294, %s25, 1
        %s296 = smul.addr %s295, 4
        %s297 = scalar_lea.vmem %s0, %s296
        %p298 = scmp.lt.s32.totalorder %s25, 1
        %s299 = scalar_select %p298, %s25, 1
        %s300 = smul.addr %s299, 4
        %s301 = scalar_lea.vmem %s1, %s300
        %v303 = vld [vmem:[%s297] sm:$0xf]
        %v304 = vld [vmem:[%s301] sm:$0xf]
        %v305 = vld [vmem:[%s2] sm:$0xf]
        %v306 = vld [vmem:[%s2 + $0x4] sm:$0xf]
        %v307 = vld [vmem:[%s2 + $0x8] sm:$0xf]
        %v308 = vld [vmem:[%s2 + $0xc] sm:$0xf]
        %v309 = vld [vmem:[%s3] sm:$0x1]
        %v311 = vperm.slane %v309, 0
        %v317 = vunpack.c.l.b16 %v305
        %v318 = vunpack.c.l.b16 %v306
        %v319 = vunpack.c.l.b16 %v307
        %v320 = vunpack.c.l.b16 %v308
        %v321 = vpack.c.b16 %v318, %v317
        %v322 = vpack.c.b16 %v320, %v319
        %vm325 = vcmask 261120
        %v327 = vsel %vm325, %v303, 0
        %329 = vmatpush.bf16.msra.mxu0 0
        %330 = vmatpush.bf16.msra.mxu0 0
        %331 = vmatpush.bf16.msra.mxu0 0
        %332 = vmatpush.bf16.msra.mxu0 0
        %333 = vmatpush.bf16.msra.mxu0 0
        %334 = vmatpush.bf16.msra.mxu0 0
        %335 = vmatpush.bf16.msra.mxu0 %v322
        %336 = vmatpush.bf16.msra.mxu0 %v321
        %337 = vmatmul.bf16.gmra.mxu0 %v327
        %v338 = vpop.f32.mrf.mxu0
        %v339 = vadd.f32 %v311, %v338
        %v340 = vpop.f32.mrf.mxu0
        %341 = vdwg.mxu0
        %v342 = vld [vmem:[%s4] sm:$0xf]
        %v343 = vld [vmem:[%s4 + $0x4] sm:$0xf]
        %v344 = vld [vmem:[%s4 + $0x8] sm:$0xf]
        %v345 = vld [vmem:[%s4 + $0xc] sm:$0xf]
        %v346 = vld [vmem:[%s5] sm:$0x1]
        %v348 = vperm.slane %v346, 0
        %v354 = vunpack.c.l.b16 %v342
        %v355 = vunpack.c.l.b16 %v343
        %v356 = vunpack.c.l.b16 %v344
        %v357 = vunpack.c.l.b16 %v345
        %v358 = vpack.c.b16 %v355, %v354
        %v359 = vpack.c.b16 %v357, %v356
        %v363 = vsel %vm325, %v304, 0
        %365 = vmatpush.bf16.msra.mxu0 0
        %366 = vmatpush.bf16.msra.mxu0 0
        %367 = vmatpush.bf16.msra.mxu0 0
        %368 = vmatpush.bf16.msra.mxu0 0
        %369 = vmatpush.bf16.msra.mxu0 0
        %370 = vmatpush.bf16.msra.mxu0 0
        %371 = vmatpush.bf16.msra.mxu0 %v359
        %372 = vmatpush.bf16.msra.mxu0 %v358
        %373 = vmatmul.bf16.gmra.mxu0 %v363
        %v374 = vpop.f32.mrf.mxu0
        %v375 = vadd.f32 %v348, %v374
        %v376 = vpop.f32.mrf.mxu0
        %377 = vdwg.mxu0
        %v378 = vpack.c.bf16 %v339, %v339
        %vm379 = vcmask 60416
        %380 = vst.msk [vmem:[%s286] sm:$0xf] %vm379, %v378
        %v381 = vpack.c.bf16 %v375, %v375
        %382 = vst.msk [vmem:[%s293] sm:$0xf] %vm379, %v381
        %s383 = scalar_lea.vmem %s2, 16
        %v384 = vld [vmem:[%s383] sm:$0xf]
        %v385 = vld [vmem:[%s383 + $0x4] sm:$0xf]
        %v386 = vld [vmem:[%s383 + $0x8] sm:$0xf]
        %v387 = vld [vmem:[%s383 + $0xc] sm:$0xf]
        %s388 = scalar_lea.vmem %s3, 1
        %v389 = vld [vmem:[%s388] sm:$0x1]
        %v391 = vperm.slane %v389, 0
        %v397 = vunpack.c.l.b16 %v384
        %v398 = vunpack.c.l.b16 %v385
        %v399 = vunpack.c.l.b16 %v386
        %v400 = vunpack.c.l.b16 %v387
        %v401 = vpack.c.b16 %v398, %v397
        %v402 = vpack.c.b16 %v400, %v399
        %405 = vmatpush.bf16.msra.mxu0 0
        %406 = vmatpush.bf16.msra.mxu0 0
        %407 = vmatpush.bf16.msra.mxu0 0
        %408 = vmatpush.bf16.msra.mxu0 0
        %409 = vmatpush.bf16.msra.mxu0 0
        %410 = vmatpush.bf16.msra.mxu0 0
        %411 = vmatpush.bf16.msra.mxu0 %v402
        %412 = vmatpush.bf16.msra.mxu0 %v401
        %413 = vmatmul.bf16.gmra.mxu0 %v327
        %v414 = vpop.f32.mrf.mxu0
        %v415 = vadd.f32 %v391, %v414
        %v416 = vpop.f32.mrf.mxu0
        %417 = vdwg.mxu0
        %s418 = scalar_lea.vmem %s4, 16
        %v419 = vld [vmem:[%s418] sm:$0xf]
        %v420 = vld [vmem:[%s418 + $0x4] sm:$0xf]
        %v421 = vld [vmem:[%s418 + $0x8] sm:$0xf]
        %v422 = vld [vmem:[%s418 + $0xc] sm:$0xf]
        %s423 = scalar_lea.vmem %s5, 1
        %v424 = vld [vmem:[%s423] sm:$0x1]
        %v426 = vperm.slane %v424, 0
        %v432 = vunpack.c.l.b16 %v419
        %v433 = vunpack.c.l.b16 %v420
        %v434 = vunpack.c.l.b16 %v421
        %v435 = vunpack.c.l.b16 %v422
        %v436 = vpack.c.b16 %v433, %v432
        %v437 = vpack.c.b16 %v435, %v434
        %440 = vmatpush.bf16.msra.mxu0 0
        %441 = vmatpush.bf16.msra.mxu0 0
        %442 = vmatpush.bf16.msra.mxu0 0
        %443 = vmatpush.bf16.msra.mxu0 0
        %444 = vmatpush.bf16.msra.mxu0 0
        %445 = vmatpush.bf16.msra.mxu0 0
        %446 = vmatpush.bf16.msra.mxu0 %v437
        %447 = vmatpush.bf16.msra.mxu0 %v436
        %448 = vmatmul.bf16.gmra.mxu0 %v363
        %v449 = vpop.f32.mrf.mxu0
        %v450 = vadd.f32 %v426, %v449
        %v451 = vpop.f32.mrf.mxu0
        %452 = vdwg.mxu0
        %v453 = vpack.c.bf16 %v415, %v415
        %s454 = scalar_lea.vmem %s286, 4 [#allocation2]
        %455 = vst.msk [vmem:[%s454] sm:$0xf] %vm379, %v453
        %v456 = vpack.c.bf16 %v450, %v450
        %s457 = scalar_lea.vmem %s293, 4 [#allocation4]
        %458 = vst.msk [vmem:[%s457] sm:$0xf] %vm379, %v456
        %s459 = scalar_lea.vmem %s2, 32
        %v460 = vld [vmem:[%s459] sm:$0xf]
        %v461 = vld [vmem:[%s459 + $0x4] sm:$0xf]
        %v462 = vld [vmem:[%s459 + $0x8] sm:$0xf]
        %v463 = vld [vmem:[%s459 + $0xc] sm:$0xf]
        %s464 = scalar_lea.vmem %s3, 2
        %v465 = vld [vmem:[%s464] sm:$0x1]
        %v467 = vperm.slane %v465, 0
        %v473 = vunpack.c.l.b16 %v460
        %v474 = vunpack.c.l.b16 %v461
        %v475 = vunpack.c.l.b16 %v462
        %v476 = vunpack.c.l.b16 %v463
        %v477 = vpack.c.b16 %v474, %v473
        %v478 = vpack.c.b16 %v476, %v475
        %481 = vmatpush.bf16.msra.mxu0 0
        %482 = vmatpush.bf16.msra.mxu0 0
        %483 = vmatpush.bf16.msra.mxu0 0
        %484 = vmatpush.bf16.msra.mxu0 0
        %485 = vmatpush.bf16.msra.mxu0 0
        %486 = vmatpush.bf16.msra.mxu0 0
        %487 = vmatpush.bf16.msra.mxu0 %v478
        %488 = vmatpush.bf16.msra.mxu0 %v477
        %489 = vmatmul.bf16.gmra.mxu0 %v327
        %v490 = vpop.f32.mrf.mxu0
        %v491 = vadd.f32 %v467, %v490
        %v492 = vpop.f32.mrf.mxu0
        %493 = vdwg.mxu0
        %s494 = scalar_lea.vmem %s4, 32
        %v495 = vld [vmem:[%s494] sm:$0xf]
        %v496 = vld [vmem:[%s494 + $0x4] sm:$0xf]
        %v497 = vld [vmem:[%s494 + $0x8] sm:$0xf]
        %v498 = vld [vmem:[%s494 + $0xc] sm:$0xf]
        %s499 = scalar_lea.vmem %s5, 2
        %v500 = vld [vmem:[%s499] sm:$0x1]
        %v502 = vperm.slane %v500, 0
        %v508 = vunpack.c.l.b16 %v495
        %v509 = vunpack.c.l.b16 %v496
        %v510 = vunpack.c.l.b16 %v497
        %v511 = vunpack.c.l.b16 %v498
        %v512 = vpack.c.b16 %v509, %v508
        %v513 = vpack.c.b16 %v511, %v510
        %516 = vmatpush.bf16.msra.mxu0 0
        %517 = vmatpush.bf16.msra.mxu0 0
        %518 = vmatpush.bf16.msra.mxu0 0
        %519 = vmatpush.bf16.msra.mxu0 0
        %520 = vmatpush.bf16.msra.mxu0 0
        %521 = vmatpush.bf16.msra.mxu0 0
        %522 = vmatpush.bf16.msra.mxu0 %v513
        %523 = vmatpush.bf16.msra.mxu0 %v512
        %524 = vmatmul.bf16.gmra.mxu0 %v363
        %v525 = vpop.f32.mrf.mxu0
        %v526 = vadd.f32 %v502, %v525
        %v527 = vpop.f32.mrf.mxu0
        %528 = vdwg.mxu0
        %v529 = vpack.c.bf16 %v491, %v491
        %s530 = scalar_lea.vmem %s286, 8 [#allocation2]
        %531 = vst.msk [vmem:[%s530] sm:$0xf] %vm379, %v529
        %v532 = vpack.c.bf16 %v526, %v526
        %s533 = scalar_lea.vmem %s293, 8 [#allocation4]
        %534 = vst.msk [vmem:[%s533] sm:$0xf] %vm379, %v532
        %s535 = scalar_lea.vmem %s2, 48
        %v536 = vld [vmem:[%s535] sm:$0xf]
        %v537 = vld [vmem:[%s535 + $0x4] sm:$0xf]
        %v538 = vld [vmem:[%s535 + $0x8] sm:$0xf]
        %v539 = vld [vmem:[%s535 + $0xc] sm:$0xf]
        %s540 = scalar_lea.vmem %s3, 3
        %v541 = vld [vmem:[%s540] sm:$0x1]
        %v543 = vperm.slane %v541, 0
        %v549 = vunpack.c.l.b16 %v536
        %v550 = vunpack.c.l.b16 %v537
        %v551 = vunpack.c.l.b16 %v538
        %v552 = vunpack.c.l.b16 %v539
        %v553 = vpack.c.b16 %v550, %v549
        %v554 = vpack.c.b16 %v552, %v551
        %557 = vmatpush.bf16.msra.mxu0 0
        %558 = vmatpush.bf16.msra.mxu0 0
        %559 = vmatpush.bf16.msra.mxu0 0
        %560 = vmatpush.bf16.msra.mxu0 0
        %561 = vmatpush.bf16.msra.mxu0 0
        %562 = vmatpush.bf16.msra.mxu0 0
        %563 = vmatpush.bf16.msra.mxu0 %v554
        %564 = vmatpush.bf16.msra.mxu0 %v553
        %565 = vmatmul.bf16.gmra.mxu0 %v327
        %v566 = vpop.f32.mrf.mxu0
        %v567 = vadd.f32 %v543, %v566
        %v568 = vpop.f32.mrf.mxu0
        %569 = vdwg.mxu0
        %s570 = scalar_lea.vmem %s4, 48
        %v571 = vld [vmem:[%s570] sm:$0xf]
        %v572 = vld [vmem:[%s570 + $0x4] sm:$0xf]
        %v573 = vld [vmem:[%s570 + $0x8] sm:$0xf]
        %v574 = vld [vmem:[%s570 + $0xc] sm:$0xf]
        %s575 = scalar_lea.vmem %s5, 3
        %v576 = vld [vmem:[%s575] sm:$0x1]
        %v578 = vperm.slane %v576, 0
        %v584 = vunpack.c.l.b16 %v571
        %v585 = vunpack.c.l.b16 %v572
        %v586 = vunpack.c.l.b16 %v573
        %v587 = vunpack.c.l.b16 %v574
        %v588 = vpack.c.b16 %v585, %v584
        %v589 = vpack.c.b16 %v587, %v586
        %592 = vmatpush.bf16.msra.mxu0 0
        %593 = vmatpush.bf16.msra.mxu0 0
        %594 = vmatpush.bf16.msra.mxu0 0
        %595 = vmatpush.bf16.msra.mxu0 0
        %596 = vmatpush.bf16.msra.mxu0 0
        %597 = vmatpush.bf16.msra.mxu0 0
        %598 = vmatpush.bf16.msra.mxu0 %v589
        %599 = vmatpush.bf16.msra.mxu0 %v588
        %600 = vmatmul.bf16.gmra.mxu0 %v363
        %v601 = vpop.f32.mrf.mxu0
        %v602 = vadd.f32 %v578, %v601
        %v603 = vpop.f32.mrf.mxu0
        %604 = vdwg.mxu0
        %v605 = vpack.c.bf16 %v567, %v567
        %s606 = scalar_lea.vmem %s286, 12 [#allocation2]
        %607 = vst.msk [vmem:[%s606] sm:$0xf] %vm379, %v605
        %v608 = vpack.c.bf16 %v602, %v602
        %s609 = scalar_lea.vmem %s293, 12 [#allocation4]
        %610 = vst.msk [vmem:[%s609] sm:$0xf] %vm379, %v608
        %s611 = sand.u32 %s169, 1
        %s612 = scalar_lea.sflag [#allocation3], %s611
        %s613 = sand.u32 %s169, 1
        %s614 = smul.addr %s613, 16
        %s615 = scalar_lea.vmem [#allocation2], %s614
        %s616 = sand.u32 %s195, 1
        %s617 = scalar_lea.sflag [#allocation5], %s616
        %s618 = sand.u32 %s195, 1
        %s619 = smul.addr %s618, 16
        %s620 = scalar_lea.vmem [#allocation4], %s619
        // Predicated region
        $region45: #{tpu_custom_call.1} parent=43 // pred_check
          %p621 = pneg %p179
        $region46: #{tpu_custom_call.1} parent=43 // pred_check_branch
          %623 = sbr.rel (%p621) target = $region48
        $region47: #{tpu_custom_call.1} parent=43 // pred_region
          %625 = vsyncadd %s612, 0
          %s626 = smul.addr %s25, 4
          %s627 = smul.addr %s626, 4
          %s628 = scalar_lea.hbm %s6, %s627
          %s629 = sshll.u32 %s615, 4
          %s630 = int_to_ptr.vmem [resolvable:$true] %s629
          %s631 = sshll.u32 %s628, 4
          %s632 = int_to_ptr.hbm [resolvable:$true] %s631
          %637 = dma.vmem_to_hbm [thread:$0]  %s630, 256, %s632, %s612, 64, 64, 4
        $region48: #{tpu_custom_call.1} parent=43 // pred_fallthru
          _
        // Predicated region
        $region49: #{tpu_custom_call.1} parent=43 // pred_check
          %p638 = pneg %p205
        $region50: #{tpu_custom_call.1} parent=43 // pred_check_branch
          %640 = sbr.rel (%p638) target = $region52
        $region51: #{tpu_custom_call.1} parent=43 // pred_region
          %642 = vsyncadd %s617, 0
          %s643 = smul.addr %s25, 4
          %s644 = smul.addr %s643, 4
          %s645 = scalar_lea.hbm %s7, %s644
          %s646 = sshll.u32 %s620, 4
          %s647 = int_to_ptr.vmem [resolvable:$true] %s646
          %s648 = sshll.u32 %s645, 4
          %s649 = int_to_ptr.hbm [resolvable:$true] %s648
          %654 = dma.vmem_to_hbm [thread:$0]  %s647, 256, %s649, %s617, 64, 64, 4
        $region52: #{tpu_custom_call.1} parent=43 // pred_fallthru
          _
      $region44: #{tpu_custom_call.1} parent=5 // pred_fallthru
        _
      %p655 = scmp.le.s32.totalorder 2, %s20
      // Predicated region
      $region53: #{tpu_custom_call.1} parent=5 // pred_check
        %p656 = pneg %p655
      $region54: #{tpu_custom_call.1} parent=5 // pred_check_branch
        %658 = sbr.rel (%p656) target = $region56
      $region55: #{tpu_custom_call.1} parent=5 // pred_region
        %s659 = ssub.s32 %s20, 2
        // Predicated region
        $region57: #{tpu_custom_call.1} parent=55 // pred_check
          %p660 = pneg %p185
        $region58: #{tpu_custom_call.1} parent=55 // pred_check_branch
          %662 = sbr.rel (%p660) target = $region60
        $region59: #{tpu_custom_call.1} parent=55 // pred_region
          %s663 = sand.u32 %s170, 1
          %s664 = scalar_lea.sflag [#allocation3], %s663
          %s665 = sand.u32 %s170, 1
          %s666 = smul.addr %s665, 16
          %s667 = scalar_lea.vmem [#allocation2], %s666
          %669 = dma.done %s664, 256
        $region60: #{tpu_custom_call.1} parent=55 // pred_fallthru
          _
        // Predicated region
        $region61: #{tpu_custom_call.1} parent=55 // pred_check
          %p670 = pneg %p211
        $region62: #{tpu_custom_call.1} parent=55 // pred_check_branch
          %672 = sbr.rel (%p670) target = $region64
        $region63: #{tpu_custom_call.1} parent=55 // pred_region
          %s673 = sand.u32 %s196, 1
          %s674 = scalar_lea.sflag [#allocation5], %s673
          %s675 = sand.u32 %s196, 1
          %s676 = smul.addr %s675, 16
          %s677 = scalar_lea.vmem [#allocation4], %s676
          %679 = dma.done %s674, 256
        $region64: #{tpu_custom_call.1} parent=55 // pred_fallthru
          _
      $region56: #{tpu_custom_call.1} parent=5 // pred_fallthru
        _
    $region6: #{tpu_custom_call.1} parent=1 // loop_footer
      %s24 = sadd.s32 1, %s20
    $region7: #{tpu_custom_call.1} parent=1 // loop_footer_branch
      %19 = sbr.rel target = $region3
    $region8: #{tpu_custom_call.1} parent=1 // loop_exit
      _
    %680 = vsyncpa [#allocation3], 1
    %s681 = scalar_lea.sflag [#allocation3], 1
    %682 = vsyncpa %s681, 1
    %683 = vsyncpa [#allocation5], 1
    %s684 = scalar_lea.sflag [#allocation5], 1
    %685 = vsyncpa %s684, 1

// kernel: tpu_custom_call.1
$region0: #{tpu_custom_call.1}
  #allocation0 [shape = 'u32[]', space=smem, size = 0x4, offset = 0x4, fixed_abs, tag = 'smem constant byte address 0x4 - core index']
  #allocation1 [shape = 'u32[72,128]{1,0:T(1,128)}', space=vmem, size = 0x9000, scoped, tag = 'internal scratch']
  %s0 = inlined_call_operand.vmem [shape: bf16[2,8,32], index: 0, kind: input, shape index: {}]
  %s1 = inlined_call_operand.vmem [shape: bf16[2,8,32], index: 1, kind: input, shape index: {}]
  %s2 = inlined_call_operand.vmem [shape: bf16[4,32,8], index: 2, kind: input, shape index: {}]
  %s3 = inlined_call_operand.vmem [shape: f32[4,1,8], index: 3, kind: input, shape index: {}]
  %s4 = inlined_call_operand.vmem [shape: bf16[4,32,8], index: 4, kind: input, shape index: {}]
  %s5 = inlined_call_operand.vmem [shape: f32[4,1,8], index: 5, kind: input, shape index: {}]
  %s6 = inlined_call_operand.hbm [shape: bf16[2,4,8,8], index: 6, kind: output, shape index: {0}]
  %s7 = inlined_call_operand.hbm [shape: bf16[2,4,8,8], index: 7, kind: output, shape index: {1}]
  %8 = xla_tuple %s6, %s7
  %s9 = sld [smem:[#allocation0]]
  $region65: #{tpu_custom_call.1} parent=0
    _
  %s11 = ssub.s32 1, %s9
  %s12 = scalar_select 0, %s11, %s9
  $region1: #{tpu_custom_call.1} parent=0
    #allocation2 [shape = 'u8[16384]{0}', space=vmem, size = 0x4000, scoped, tag = 'output window, operand 0']
    #allocation3 [shape = 's32[2]{0}', space=sflag, size = 0x8, scoped, tag = 'scoped memory for tpu_custom_call.1']
    #allocation4 [shape = 'u8[16384]{0}', space=vmem, size = 0x4000, scoped, tag = 'output window, operand 1']
    #allocation5 [shape = 's32[2]{0}', space=sflag, size = 0x8, scoped, tag = 'scoped memory for tpu_custom_call.1']
    %13 = vsyncpa [#allocation3], 0
    %s14 = scalar_lea.sflag [#allocation3], 1
    %15 = vsyncpa %s14, 0
    %16 = vsyncpa [#allocation5], 0
    %s17 = scalar_lea.sflag [#allocation5], 1
    %18 = vsyncpa %s17, 0
    loop: start=0, step=1, limit=4
    $region2: #{tpu_custom_call.1} parent=1 // loop_pre_header
      _
    $region3: #{tpu_custom_call.1} parent=1 // loop_header
      %s20 = sphi 0, %s24
      %p21 = scmp.ge.s32.totalorder %s20, 4
      %s30 = sphi 0, %s32
      %s33 = sphi 0, %s30
      %s34 = sphi 0, %s33
      %s50 = sphi 0, %s34
      %s56 = sphi 0, %s58
      %s59 = sphi 0, %s56
      %s60 = sphi 0, %s59
      %s76 = sphi 0, %s60
      %s80 = sphi 0, %s80
      %s82 = sphi 0, %s80
      %s83 = sphi 0, %s82
      %s97 = sphi 0, %s83
      %s101 = sphi 0, %s101
      %s103 = sphi 0, %s101
      %s104 = sphi 0, %s103
      %s118 = sphi 0, %s104
      %s122 = sphi 0, %s122
      %s124 = sphi 0, %s122
      %s125 = sphi 0, %s124
      %s139 = sphi 0, %s125
      %s143 = sphi 0, %s143
      %s145 = sphi 0, %s143
      %s146 = sphi 0, %s145
      %s160 = sphi 0, %s146
      %s166 = sphi 0, %s168
      %s169 = sphi 0, %s166
      %s170 = sphi 0, %s169
      %s186 = sphi 0, %s170
      %s192 = sphi 0, %s194
      %s195 = sphi 0, %s192
      %s196 = sphi 0, %s195
      %s212 = sphi 0, %s196
    $region4: #{tpu_custom_call.1} parent=1 // loop_header_branch
      %23 = sbr.rel (%p21) target = $region8
    $region5: #{tpu_custom_call.1} parent=1 // loop_body
      %s25 = ssub.s32 %s20, 1
      %s26 = ssub.s32 %s20, 2
      %s27 = sadd.s32 %s20, 1
      %s28 = ssub.s32 %s20, %s27
      %p29 = scmp.eq.s32.totalorder %s28, 0
      %s31 = sadd.s32 %s30, 1
      %s32 = scalar_select %p29, %s30, %s31
      %p35 = pneg %p29
      %p36 = scmp.eq.s32.totalorder %s20, 1
      %p37 = por %p35, %p36
      %p38 = scmp.ne.s32.totalorder %s30, %s33
      %p39 = scmp.eq.s32.totalorder %s20, 0
      %p40 = por %p38, %p39
      %p41 = scmp.ne.s32.totalorder %s30, %s33
      %p42 = scmp.eq.s32.totalorder %s25, 1
      %p43 = por %p41, %p42
      %p44 = scmp.ne.s32.totalorder %s33, %s34
      %p45 = scmp.eq.s32.totalorder %s25, 0
      %p46 = por %p44, %p45
      %p47 = scmp.ne.s32.totalorder %s33, %s34
      %p48 = scmp.eq.s32.totalorder %s26, 1
      %p49 = por %p47, %p48
      %p51 = scmp.ne.s32.totalorder %s34, %s50
      %p52 = scmp.eq.s32.totalorder %s26, 0
      %p53 = por %p51, %p52
      %s54 = ssub.s32 %s20, %s27
      %p55 = scmp.eq.s32.totalorder %s54, 0
      %s57 = sadd.s32 %s56, 1
      %s58 = scalar_select %p55, %s56, %s57
      %p61 = pneg %p55
      %p62 = scmp.eq.s32.totalorder %s20, 1
      %p63 = por %p61, %p62
      %p64 = scmp.ne.s32.totalorder %s56, %s59
      %p65 = scmp.eq.s32.totalorder %s20, 0
      %p66 = por %p64, %p65
      %p67 = scmp.ne.s32.totalorder %s56, %s59
      %p68 = scmp.eq.s32.totalorder %s25, 1
      %p69 = por %p67, %p68
      %p70 = scmp.ne.s32.totalorder %s59, %s60
      %p71 = scmp.eq.s32.totalorder %s25, 0
      %p72 = por %p70, %p71
      %p73 = scmp.ne.s32.totalorder %s59, %s60
      %p74 = scmp.eq.s32.totalorder %s26, 1
      %p75 = por %p73, %p74
      %p77 = scmp.ne.s32.totalorder %s60, %s76
      %p78 = scmp.eq.s32.totalorder %s26, 0
      %p79 = por %p77, %p78
      %s81 = sadd.s32 %s80, 1
      %p84 = scmp.eq.s32.totalorder %s20, 1
      %p85 = scmp.ne.s32.totalorder %s80, %s82
      %p86 = scmp.eq.s32.totalorder %s20, 0
      %p87 = por %p85, %p86
      %p88 = scmp.ne.s32.totalorder %s80, %s82
      %p89 = scmp.eq.s32.totalorder %s25, 1
      %p90 = por %p88, %p89
      %p91 = scmp.ne.s32.totalorder %s82, %s83
      %p92 = scmp.eq.s32.totalorder %s25, 0
      %p93 = por %p91, %p92
      %p94 = scmp.ne.s32.totalorder %s82, %s83
      %p95 = scmp.eq.s32.totalorder %s26, 1
      %p96 = por %p94, %p95
      %p98 = scmp.ne.s32.totalorder %s83, %s97
      %p99 = scmp.eq.s32.totalorder %s26, 0
      %p100 = por %p98, %p99
      %s102 = sadd.s32 %s101, 1
      %p105 = scmp.eq.s32.totalorder %s20, 1
      %p106 = scmp.ne.s32.totalorder %s101, %s103
      %p107 = scmp.eq.s32.totalorder %s20, 0
      %p108 = por %p106, %p107
      %p109 = scmp.ne.s32.totalorder %s101, %s103
      %p110 = scmp.eq.s32.totalorder %s25, 1
      %p111 = por %p109, %p110
      %p112 = scmp.ne.s32.totalorder %s103, %s104
      %p113 = scmp.eq.s32.totalorder %s25, 0
      %p114 = por %p112, %p113
      %p115 = scmp.ne.s32.totalorder %s103, %s104
      %p116 = scmp.eq.s32.totalorder %s26, 1
      %p117 = por %p115, %p116
      %p119 = scmp.ne.s32.totalorder %s104, %s118
      %p120 = scmp.eq.s32.totalorder %s26, 0
      %p121 = por %p119, %p120
      %s123 = sadd.s32 %s122, 1
      %p126 = scmp.eq.s32.totalorder %s20, 1
      %p127 = scmp.ne.s32.totalorder %s122, %s124
      %p128 = scmp.eq.s32.totalorder %s20, 0
      %p129 = por %p127, %p128
      %p130 = scmp.ne.s32.totalorder %s122, %s124
      %p131 = scmp.eq.s32.totalorder %s25, 1
      %p132 = por %p130, %p131
      %p133 = scmp.ne.s32.totalorder %s124, %s125
      %p134 = scmp.eq.s32.totalorder %s25, 0
      %p135 = por %p133, %p134
      %p136 = scmp.ne.s32.totalorder %s124, %s125
      %p137 = scmp.eq.s32.totalorder %s26, 1
      %p138 = por %p136, %p137
      %p140 = scmp.ne.s32.totalorder %s125, %s139
      %p141 = scmp.eq.s32.totalorder %s26, 0
      %p142 = por %p140, %p141
      %s144 = sadd.s32 %s143, 1
      %p147 = scmp.eq.s32.totalorder %s20, 1
      %p148 = scmp.ne.s32.totalorder %s143, %s145
      %p149 = scmp.eq.s32.totalorder %s20, 0
      %p150 = por %p148, %p149
      %p151 = scmp.ne.s32.totalorder %s143, %s145
      %p152 = scmp.eq.s32.totalorder %s25, 1
      %p153 = por %p151, %p152
      %p154 = scmp.ne.s32.totalorder %s145, %s146
      %p155 = scmp.eq.s32.totalorder %s25, 0
      %p156 = por %p154, %p155
      %p157 = scmp.ne.s32.totalorder %s145, %s146
      %p158 = scmp.eq.s32.totalorder %s26, 1
      %p159 = por %p157, %p158
      %p161 = scmp.ne.s32.totalorder %s146, %s160
      %p162 = scmp.eq.s32.totalorder %s26, 0
      %p163 = por %p161, %p162
      %s164 = ssub.s32 %s20, %s27
      %p165 = scmp.eq.s32.totalorder %s164, 0
      %s167 = sadd.s32 %s166, 1
      %s168 = scalar_select %p165, %s166, %s167
      %p171 = pneg %p165
      %p172 = scmp.eq.s32.totalorder %s20, 1
      %p173 = por %p171, %p172
      %p174 = scmp.ne.s32.totalorder %s166, %s169
      %p175 = scmp.eq.s32.totalorder %s20, 0
      %p176 = por %p174, %p175
      %p177 = scmp.ne.s32.totalorder %s166, %s169
      %p178 = scmp.eq.s32.totalorder %s25, 1
      %p179 = por %p177, %p178
      %p180 = scmp.ne.s32.totalorder %s169, %s170
      %p181 = scmp.eq.s32.totalorder %s25, 0
      %p182 = por %p180, %p181
      %p183 = scmp.ne.s32.totalorder %s169, %s170
      %p184 = scmp.eq.s32.totalorder %s26, 1
      %p185 = por %p183, %p184
      %p187 = scmp.ne.s32.totalorder %s170, %s186
      %p188 = scmp.eq.s32.totalorder %s26, 0
      %p189 = por %p187, %p188
      %s190 = ssub.s32 %s20, %s27
      %p191 = scmp.eq.s32.totalorder %s190, 0
      %s193 = sadd.s32 %s192, 1
      %s194 = scalar_select %p191, %s192, %s193
      %p197 = pneg %p191
      %p198 = scmp.eq.s32.totalorder %s20, 1
      %p199 = por %p197, %p198
      %p200 = scmp.ne.s32.totalorder %s192, %s195
      %p201 = scmp.eq.s32.totalorder %s20, 0
      %p202 = por %p200, %p201
      %p203 = scmp.ne.s32.totalorder %s192, %s195
      %p204 = scmp.eq.s32.totalorder %s25, 1
      %p205 = por %p203, %p204
      %p206 = scmp.ne.s32.totalorder %s195, %s196
      %p207 = scmp.eq.s32.totalorder %s25, 0
      %p208 = por %p206, %p207
      %p209 = scmp.ne.s32.totalorder %s195, %s196
      %p210 = scmp.eq.s32.totalorder %s26, 1
      %p211 = por %p209, %p210
      %p213 = scmp.ne.s32.totalorder %s196, %s212
      %p214 = scmp.eq.s32.totalorder %s26, 0
      %p215 = por %p213, %p214
      %p216 = scmp.le.s32.totalorder 1, %s20
      %p217 = scmp.lt.s32.totalorder %s20, 3
      %p218 = pnand %p216, %p217
      %p219 = pneg %p218
      // Predicated region
      $region9: #{tpu_custom_call.1} parent=5 // pred_check
        _
      $region10: #{tpu_custom_call.1} parent=5 // pred_check_branch
        %221 = sbr.rel (%p218) target = $region12
      $region11: #{tpu_custom_call.1} parent=5 // pred_region
        %s222 = ssub.s32 %s20, 1
        // Predicated region
        $region13: #{tpu_custom_call.1} parent=11 // pred_check
          %p223 = pneg %p93
        $region14: #{tpu_custom_call.1} parent=11 // pred_check_branch
          %225 = sbr.rel (%p223) target = $region16
        $region15: #{tpu_custom_call.1} parent=11 // pred_region
          _
        $region16: #{tpu_custom_call.1} parent=11 // pred_fallthru
          _
        // Predicated region
        $region17: #{tpu_custom_call.1} parent=11 // pred_check
          %p226 = pneg %p114
        $region18: #{tpu_custom_call.1} parent=11 // pred_check_branch
          %228 = sbr.rel (%p226) target = $region20
        $region19: #{tpu_custom_call.1} parent=11 // pred_region
          _
        $region20: #{tpu_custom_call.1} parent=11 // pred_fallthru
          _
        // Predicated region
        $region21: #{tpu_custom_call.1} parent=11 // pred_check
          %p229 = pneg %p135
        $region22: #{tpu_custom_call.1} parent=11 // pred_check_branch
          %231 = sbr.rel (%p229) target = $region24
        $region23: #{tpu_custom_call.1} parent=11 // pred_region
          _
        $region24: #{tpu_custom_call.1} parent=11 // pred_fallthru
          _
        // Predicated region
        $region25: #{tpu_custom_call.1} parent=11 // pred_check
          %p232 = pneg %p156
        $region26: #{tpu_custom_call.1} parent=11 // pred_check_branch
          %234 = sbr.rel (%p232) target = $region28
        $region27: #{tpu_custom_call.1} parent=11 // pred_region
          _
        $region28: #{tpu_custom_call.1} parent=11 // pred_fallthru
          _
      $region12: #{tpu_custom_call.1} parent=5 // pred_fallthru
        _
      %p235 = scmp.lt.s32.totalorder %s20, 2
      // Predicated region
      $region29: #{tpu_custom_call.1} parent=5 // pred_check
        %p236 = pneg %p235
      $region30: #{tpu_custom_call.1} parent=5 // pred_check_branch
        %238 = sbr.rel (%p236) target = $region32
      $region31: #{tpu_custom_call.1} parent=5 // pred_region
        // Predicated region
        $region33: #{tpu_custom_call.1} parent=31 // pred_check
          %p239 = pneg %p40
        $region34: #{tpu_custom_call.1} parent=31 // pred_check_branch
          %241 = sbr.rel (%p239) target = $region36
        $region35: #{tpu_custom_call.1} parent=31 // pred_region
          %p242 = scmp.lt.s32.totalorder %s20, 1
          %s243 = scalar_select %p242, %s20, 1
          %s244 = smul.addr %s243, 4
          %s245 = scalar_lea.vmem %s0, %s244
        $region36: #{tpu_custom_call.1} parent=31 // pred_fallthru
          _
        // Predicated region
        $region37: #{tpu_custom_call.1} parent=31 // pred_check
          %p246 = pneg %p66
        $region38: #{tpu_custom_call.1} parent=31 // pred_check_branch
          %248 = sbr.rel (%p246) target = $region40
        $region39: #{tpu_custom_call.1} parent=31 // pred_region
          %p249 = scmp.lt.s32.totalorder %s20, 1
          %s250 = scalar_select %p249, %s20, 1
          %s251 = smul.addr %s250, 4
          %s252 = scalar_lea.vmem %s1, %s251
        $region40: #{tpu_custom_call.1} parent=31 // pred_fallthru
          _
      $region32: #{tpu_custom_call.1} parent=5 // pred_fallthru
        _
      %p253 = scmp.le.s32.totalorder 1, %s20
      %p254 = scmp.lt.s32.totalorder %s20, 3
      %p255 = pnand %p253, %p254
      %p256 = pneg %p255
      // Predicated region
      $region41: #{tpu_custom_call.1} parent=5 // pred_check
        _
      $region42: #{tpu_custom_call.1} parent=5 // pred_check_branch
        %258 = sbr.rel (%p255) target = $region44
      $region43: #{tpu_custom_call.1} parent=5 // pred_region
        %s259 = ssub.s32 %s20, 1
        %p260 = scmp.lt.s32.totalorder %s25, 1
        %s261 = scalar_select %p260, %s25, 1
        %s262 = smul.addr %s261, 4
        %s263 = scalar_lea.vmem %s0, %s262
        %p264 = pneg %p46
        %p265 = pneg %p43
        %p266 = scmp.lt.s32.totalorder %s25, 1
        %s267 = scalar_select %p266, %s25, 1
        %s268 = smul.addr %s267, 4
        %s269 = scalar_lea.vmem %s1, %s268
        %p270 = pneg %p72
        %p271 = pneg %p69
        %p272 = pneg %p93
        %p273 = pneg %p90
        %p274 = pneg %p114
        %p275 = pneg %p111
        %p276 = pneg %p135
        %p277 = pneg %p132
        %p278 = pneg %p156
        %p279 = pneg %p153
        %p280 = pneg %p182
        %p281 = pneg %p179
        %s282 = sand.u32 %s169, 1
        %s283 = scalar_lea.sflag [#allocation3], %s282
        %s284 = sand.u32 %s169, 1
        %s285 = smul.addr %s284, 16
        %s286 = scalar_lea.vmem [#allocation2], %s285
        %p287 = pneg %p208
        %p288 = pneg %p205
        %s289 = sand.u32 %s195, 1
        %s290 = scalar_lea.sflag [#allocation5], %s289
        %s291 = sand.u32 %s195, 1
        %s292 = smul.addr %s291, 16
        %s293 = scalar_lea.vmem [#allocation4], %s292
        %p294 = scmp.lt.s32.totalorder %s25, 1
        %s295 = scalar_select %p294, %s25, 1
        %s296 = smul.addr %s295, 4
        %s297 = scalar_lea.vmem %s0, %s296
        %p298 = scmp.lt.s32.totalorder %s25, 1
        %s299 = scalar_select %p298, %s25, 1
        %s300 = smul.addr %s299, 4
        %s301 = scalar_lea.vmem %s1, %s300
        %v303 = vld [vmem:[%s297] sm:$0xf]
        %v304 = vld [vmem:[%s301] sm:$0xf]
        %v305 = vld [vmem:[%s2] sm:$0xf]
        %v306 = vld [vmem:[%s2 + $0x4] sm:$0xf]
        %v307 = vld [vmem:[%s2 + $0x8] sm:$0xf]
        %v308 = vld [vmem:[%s2 + $0xc] sm:$0xf]
        %v309 = vld [vmem:[%s3] sm:$0x1]
        %v311 = vperm.slane %v309, 0
        %v317 = vunpack.c.l.b16 %v305
        %v318 = vunpack.c.l.b16 %v306
        %v319 = vunpack.c.l.b16 %v307
        %v320 = vunpack.c.l.b16 %v308
        %v321 = vpack.c.b16 %v318, %v317
        %v322 = vpack.c.b16 %v320, %v319
        %vm325 = vcmask 261120
        %v327 = vsel %vm325, %v303, 0
        %329 = vmatpush.bf16.msra.mxu0 0
        %330 = vmatpush.bf16.msra.mxu0 0
        %331 = vmatpush.bf16.msra.mxu0 0
        %332 = vmatpush.bf16.msra.mxu0 0
        %333 = vmatpush.bf16.msra.mxu0 0
        %334 = vmatpush.bf16.msra.mxu0 0
        %335 = vmatpush.bf16.msra.mxu0 %v322
        %336 = vmatpush.bf16.msra.mxu0 %v321
        %337 = vmatmul.bf16.gmra.mxu0 %v327
        %v338 = vpop.f32.mrf.mxu0
        %v339 = vadd.f32 %v311, %v338
        %v340 = vpop.f32.mrf.mxu0
        %341 = vdwg.mxu0
        %v342 = vld [vmem:[%s4] sm:$0xf]
        %v343 = vld [vmem:[%s4 + $0x4] sm:$0xf]
        %v344 = vld [vmem:[%s4 + $0x8] sm:$0xf]
        %v345 = vld [vmem:[%s4 + $0xc] sm:$0xf]
        %v346 = vld [vmem:[%s5] sm:$0x1]
        %v348 = vperm.slane %v346, 0
        %v354 = vunpack.c.l.b16 %v342
        %v355 = vunpack.c.l.b16 %v343
        %v356 = vunpack.c.l.b16 %v344
        %v357 = vunpack.c.l.b16 %v345
        %v358 = vpack.c.b16 %v355, %v354
        %v359 = vpack.c.b16 %v357, %v356
        %v363 = vsel %vm325, %v304, 0
        %365 = vmatpush.bf16.msra.mxu0 0
        %366 = vmatpush.bf16.msra.mxu0 0
        %367 = vmatpush.bf16.msra.mxu0 0
        %368 = vmatpush.bf16.msra.mxu0 0
        %369 = vmatpush.bf16.msra.mxu0 0
        %370 = vmatpush.bf16.msra.mxu0 0
        %371 = vmatpush.bf16.msra.mxu0 %v359
        %372 = vmatpush.bf16.msra.mxu0 %v358
        %373 = vmatmul.bf16.gmra.mxu0 %v363
        %v374 = vpop.f32.mrf.mxu0
        %v375 = vadd.f32 %v348, %v374
        %v376 = vpop.f32.mrf.mxu0
        %377 = vdwg.mxu0
        %v378 = vpack.c.bf16 %v339, %v339
        %vm379 = vcmask 60416
        %380 = vst.msk [vmem:[%s286] sm:$0xf] %vm379, %v378
        %v381 = vpack.c.bf16 %v375, %v375
        %382 = vst.msk [vmem:[%s293] sm:$0xf] %vm379, %v381
        %s383 = scalar_lea.vmem %s2, 16
        %v384 = vld [vmem:[%s383] sm:$0xf]
        %v385 = vld [vmem:[%s383 + $0x4] sm:$0xf]
        %v386 = vld [vmem:[%s383 + $0x8] sm:$0xf]
        %v387 = vld [vmem:[%s383 + $0xc] sm:$0xf]
        %s388 = scalar_lea.vmem %s3, 1
        %v389 = vld [vmem:[%s388] sm:$0x1]
        %v391 = vperm.slane %v389, 0
        %v397 = vunpack.c.l.b16 %v384
        %v398 = vunpack.c.l.b16 %v385
        %v399 = vunpack.c.l.b16 %v386
        %v400 = vunpack.c.l.b16 %v387
        %v401 = vpack.c.b16 %v398, %v397
        %v402 = vpack.c.b16 %v400, %v399
        %405 = vmatpush.bf16.msra.mxu0 0
        %406 = vmatpush.bf16.msra.mxu0 0
        %407 = vmatpush.bf16.msra.mxu0 0
        %408 = vmatpush.bf16.msra.mxu0 0
        %409 = vmatpush.bf16.msra.mxu0 0
        %410 = vmatpush.bf16.msra.mxu0 0
        %411 = vmatpush.bf16.msra.mxu0 %v402
        %412 = vmatpush.bf16.msra.mxu0 %v401
        %413 = vmatmul.bf16.gmra.mxu0 %v327
        %v414 = vpop.f32.mrf.mxu0
        %v415 = vadd.f32 %v391, %v414
        %v416 = vpop.f32.mrf.mxu0
        %417 = vdwg.mxu0
        %s418 = scalar_lea.vmem %s4, 16
        %v419 = vld [vmem:[%s418] sm:$0xf]
        %v420 = vld [vmem:[%s418 + $0x4] sm:$0xf]
        %v421 = vld [vmem:[%s418 + $0x8] sm:$0xf]
        %v422 = vld [vmem:[%s418 + $0xc] sm:$0xf]
        %s423 = scalar_lea.vmem %s5, 1
        %v424 = vld [vmem:[%s423] sm:$0x1]
        %v426 = vperm.slane %v424, 0
        %v432 = vunpack.c.l.b16 %v419
        %v433 = vunpack.c.l.b16 %v420
        %v434 = vunpack.c.l.b16 %v421
        %v435 = vunpack.c.l.b16 %v422
        %v436 = vpack.c.b16 %v433, %v432
        %v437 = vpack.c.b16 %v435, %v434
        %440 = vmatpush.bf16.msra.mxu0 0
        %441 = vmatpush.bf16.msra.mxu0 0
        %442 = vmatpush.bf16.msra.mxu0 0
        %443 = vmatpush.bf16.msra.mxu0 0
        %444 = vmatpush.bf16.msra.mxu0 0
        %445 = vmatpush.bf16.msra.mxu0 0
        %446 = vmatpush.bf16.msra.mxu0 %v437
        %447 = vmatpush.bf16.msra.mxu0 %v436
        %448 = vmatmul.bf16.gmra.mxu0 %v363
        %v449 = vpop.f32.mrf.mxu0
        %v450 = vadd.f32 %v426, %v449
        %v451 = vpop.f32.mrf.mxu0
        %452 = vdwg.mxu0
        %v453 = vpack.c.bf16 %v415, %v415
        %s454 = scalar_lea.vmem %s286, 4 [#allocation2]
        %455 = vst.msk [vmem:[%s454] sm:$0xf] %vm379, %v453
        %v456 = vpack.c.bf16 %v450, %v450
        %s457 = scalar_lea.vmem %s293, 4 [#allocation4]
        %458 = vst.msk [vmem:[%s457] sm:$0xf] %vm379, %v456
        %s459 = scalar_lea.vmem %s2, 32
        %v460 = vld [vmem:[%s459] sm:$0xf]
        %v461 = vld [vmem:[%s459 + $0x4] sm:$0xf]
        %v462 = vld [vmem:[%s459 + $0x8] sm:$0xf]
        %v463 = vld [vmem:[%s459 + $0xc] sm:$0xf]
        %s464 = scalar_lea.vmem %s3, 2
        %v465 = vld [vmem:[%s464] sm:$0x1]
        %v467 = vperm.slane %v465, 0
        %v473 = vunpack.c.l.b16 %v460
        %v474 = vunpack.c.l.b16 %v461
        %v475 = vunpack.c.l.b16 %v462
        %v476 = vunpack.c.l.b16 %v463
        %v477 = vpack.c.b16 %v474, %v473
        %v478 = vpack.c.b16 %v476, %v475
        %481 = vmatpush.bf16.msra.mxu0 0
        %482 = vmatpush.bf16.msra.mxu0 0
        %483 = vmatpush.bf16.msra.mxu0 0
        %484 = vmatpush.bf16.msra.mxu0 0
        %485 = vmatpush.bf16.msra.mxu0 0
        %486 = vmatpush.bf16.msra.mxu0 0
        %487 = vmatpush.bf16.msra.mxu0 %v478
        %488 = vmatpush.bf16.msra.mxu0 %v477
        %489 = vmatmul.bf16.gmra.mxu0 %v327
        %v490 = vpop.f32.mrf.mxu0
        %v491 = vadd.f32 %v467, %v490
        %v492 = vpop.f32.mrf.mxu0
        %493 = vdwg.mxu0
        %s494 = scalar_lea.vmem %s4, 32
        %v495 = vld [vmem:[%s494] sm:$0xf]
        %v496 = vld [vmem:[%s494 + $0x4] sm:$0xf]
        %v497 = vld [vmem:[%s494 + $0x8] sm:$0xf]
        %v498 = vld [vmem:[%s494 + $0xc] sm:$0xf]
        %s499 = scalar_lea.vmem %s5, 2
        %v500 = vld [vmem:[%s499] sm:$0x1]
        %v502 = vperm.slane %v500, 0
        %v508 = vunpack.c.l.b16 %v495
        %v509 = vunpack.c.l.b16 %v496
        %v510 = vunpack.c.l.b16 %v497
        %v511 = vunpack.c.l.b16 %v498
        %v512 = vpack.c.b16 %v509, %v508
        %v513 = vpack.c.b16 %v511, %v510
        %516 = vmatpush.bf16.msra.mxu0 0
        %517 = vmatpush.bf16.msra.mxu0 0
        %518 = vmatpush.bf16.msra.mxu0 0
        %519 = vmatpush.bf16.msra.mxu0 0
        %520 = vmatpush.bf16.msra.mxu0 0
        %521 = vmatpush.bf16.msra.mxu0 0
        %522 = vmatpush.bf16.msra.mxu0 %v513
        %523 = vmatpush.bf16.msra.mxu0 %v512
        %524 = vmatmul.bf16.gmra.mxu0 %v363
        %v525 = vpop.f32.mrf.mxu0
        %v526 = vadd.f32 %v502, %v525
        %v527 = vpop.f32.mrf.mxu0
        %528 = vdwg.mxu0
        %v529 = vpack.c.bf16 %v491, %v491
        %s530 = scalar_lea.vmem %s286, 8 [#allocation2]
        %531 = vst.msk [vmem:[%s530] sm:$0xf] %vm379, %v529
        %v532 = vpack.c.bf16 %v526, %v526
        %s533 = scalar_lea.vmem %s293, 8 [#allocation4]
        %534 = vst.msk [vmem:[%s533] sm:$0xf] %vm379, %v532
        %s535 = scalar_lea.vmem %s2, 48
        %v536 = vld [vmem:[%s535] sm:$0xf]
        %v537 = vld [vmem:[%s535 + $0x4] sm:$0xf]
        %v538 = vld [vmem:[%s535 + $0x8] sm:$0xf]
        %v539 = vld [vmem:[%s535 + $0xc] sm:$0xf]
        %s540 = scalar_lea.vmem %s3, 3
        %v541 = vld [vmem:[%s540] sm:$0x1]
        %v543 = vperm.slane %v541, 0
        %v549 = vunpack.c.l.b16 %v536
        %v550 = vunpack.c.l.b16 %v537
        %v551 = vunpack.c.l.b16 %v538
        %v552 = vunpack.c.l.b16 %v539
        %v553 = vpack.c.b16 %v550, %v549
        %v554 = vpack.c.b16 %v552, %v551
        %557 = vmatpush.bf16.msra.mxu0 0
        %558 = vmatpush.bf16.msra.mxu0 0
        %559 = vmatpush.bf16.msra.mxu0 0
        %560 = vmatpush.bf16.msra.mxu0 0
        %561 = vmatpush.bf16.msra.mxu0 0
        %562 = vmatpush.bf16.msra.mxu0 0
        %563 = vmatpush.bf16.msra.mxu0 %v554
        %564 = vmatpush.bf16.msra.mxu0 %v553
        %565 = vmatmul.bf16.gmra.mxu0 %v327
        %v566 = vpop.f32.mrf.mxu0
        %v567 = vadd.f32 %v543, %v566
        %v568 = vpop.f32.mrf.mxu0
        %569 = vdwg.mxu0
        %s570 = scalar_lea.vmem %s4, 48
        %v571 = vld [vmem:[%s570] sm:$0xf]
        %v572 = vld [vmem:[%s570 + $0x4] sm:$0xf]
        %v573 = vld [vmem:[%s570 + $0x8] sm:$0xf]
        %v574 = vld [vmem:[%s570 + $0xc] sm:$0xf]
        %s575 = scalar_lea.vmem %s5, 3
        %v576 = vld [vmem:[%s575] sm:$0x1]
        %v578 = vperm.slane %v576, 0
        %v584 = vunpack.c.l.b16 %v571
        %v585 = vunpack.c.l.b16 %v572
        %v586 = vunpack.c.l.b16 %v573
        %v587 = vunpack.c.l.b16 %v574
        %v588 = vpack.c.b16 %v585, %v584
        %v589 = vpack.c.b16 %v587, %v586
        %592 = vmatpush.bf16.msra.mxu0 0
        %593 = vmatpush.bf16.msra.mxu0 0
        %594 = vmatpush.bf16.msra.mxu0 0
        %595 = vmatpush.bf16.msra.mxu0 0
        %596 = vmatpush.bf16.msra.mxu0 0
        %597 = vmatpush.bf16.msra.mxu0 0
        %598 = vmatpush.bf16.msra.mxu0 %v589
        %599 = vmatpush.bf16.msra.mxu0 %v588
        %600 = vmatmul.bf16.gmra.mxu0 %v363
        %v601 = vpop.f32.mrf.mxu0
        %v602 = vadd.f32 %v578, %v601
        %v603 = vpop.f32.mrf.mxu0
        %604 = vdwg.mxu0
        %v605 = vpack.c.bf16 %v567, %v567
        %s606 = scalar_lea.vmem %s286, 12 [#allocation2]
        %607 = vst.msk [vmem:[%s606] sm:$0xf] %vm379, %v605
        %v608 = vpack.c.bf16 %v602, %v602
        %s609 = scalar_lea.vmem %s293, 12 [#allocation4]
        %610 = vst.msk [vmem:[%s609] sm:$0xf] %vm379, %v608
        %s611 = sand.u32 %s169, 1
        %s612 = scalar_lea.sflag [#allocation3], %s611
        %s613 = sand.u32 %s169, 1
        %s614 = smul.addr %s613, 16
        %s615 = scalar_lea.vmem [#allocation2], %s614
        %s616 = sand.u32 %s195, 1
        %s617 = scalar_lea.sflag [#allocation5], %s616
        %s618 = sand.u32 %s195, 1
        %s619 = smul.addr %s618, 16
        %s620 = scalar_lea.vmem [#allocation4], %s619
        // Predicated region
        $region45: #{tpu_custom_call.1} parent=43 // pred_check
          %p621 = pneg %p179
        $region46: #{tpu_custom_call.1} parent=43 // pred_check_branch
          %623 = sbr.rel (%p621) target = $region48
        $region47: #{tpu_custom_call.1} parent=43 // pred_region
          %625 = vsyncadd %s612, 0
          %s626 = smul.addr %s25, 4
          %s627 = smul.addr %s626, 4
          %s628 = scalar_lea.hbm %s6, %s627
          %s629 = sshll.u32 %s615, 4
          %s630 = int_to_ptr.vmem [resolvable:$true] %s629
          %s631 = sshll.u32 %s628, 4
          %s632 = int_to_ptr.hbm [resolvable:$true] %s631
          %637 = dma.vmem_to_hbm [thread:$0]  %s630, 256, %s632, %s612, 64, 64, 4
        $region48: #{tpu_custom_call.1} parent=43 // pred_fallthru
          _
        // Predicated region
        $region49: #{tpu_custom_call.1} parent=43 // pred_check
          %p638 = pneg %p205
        $region50: #{tpu_custom_call.1} parent=43 // pred_check_branch
          %640 = sbr.rel (%p638) target = $region52
        $region51: #{tpu_custom_call.1} parent=43 // pred_region
          %642 = vsyncadd %s617, 0
          %s643 = smul.addr %s25, 4
          %s644 = smul.addr %s643, 4
          %s645 = scalar_lea.hbm %s7, %s644
          %s646 = sshll.u32 %s620, 4
          %s647 = int_to_ptr.vmem [resolvable:$true] %s646
          %s648 = sshll.u32 %s645, 4
          %s649 = int_to_ptr.hbm [resolvable:$true] %s648
          %654 = dma.vmem_to_hbm [thread:$0]  %s647, 256, %s649, %s617, 64, 64, 4
        $region52: #{tpu_custom_call.1} parent=43 // pred_fallthru
          _
      $region44: #{tpu_custom_call.1} parent=5 // pred_fallthru
        _
      %p655 = scmp.le.s32.totalorder 2, %s20
      // Predicated region
      $region53: #{tpu_custom_call.1} parent=5 // pred_check
        %p656 = pneg %p655
      $region54: #{tpu_custom_call.1} parent=5 // pred_check_branch
        %658 = sbr.rel (%p656) target = $region56
      $region55: #{tpu_custom_call.1} parent=5 // pred_region
        %s659 = ssub.s32 %s20, 2
        // Predicated region
        $region57: #{tpu_custom_call.1} parent=55 // pred_check
          %p660 = pneg %p185
        $region58: #{tpu_custom_call.1} parent=55 // pred_check_branch
          %662 = sbr.rel (%p660) target = $region60
        $region59: #{tpu_custom_call.1} parent=55 // pred_region
          %s663 = sand.u32 %s170, 1
          %s664 = scalar_lea.sflag [#allocation3], %s663
          %s665 = sand.u32 %s170, 1
          %s666 = smul.addr %s665, 16
          %s667 = scalar_lea.vmem [#allocation2], %s666
          %669 = dma.done %s664, 256
        $region60: #{tpu_custom_call.1} parent=55 // pred_fallthru
          _
        // Predicated region
        $region61: #{tpu_custom_call.1} parent=55 // pred_check
          %p670 = pneg %p211
        $region62: #{tpu_custom_call.1} parent=55 // pred_check_branch
          %672 = sbr.rel (%p670) target = $region64
        $region63: #{tpu_custom_call.1} parent=55 // pred_region
          %s673 = sand.u32 %s196, 1
          %s674 = scalar_lea.sflag [#allocation5], %s673
          %s675 = sand.u32 %s196, 1
          %s676 = smul.addr %s675, 16
          %s677 = scalar_lea.vmem [#allocation4], %s676
          %679 = dma.done %s674, 256
        $region64: #{tpu_custom_call.1} parent=55 // pred_fallthru
          _
      $region56: #{tpu_custom_call.1} parent=5 // pred_fallthru
        _
    $region6: #{tpu_custom_call.1} parent=1 // loop_footer
      %s24 = sadd.s32 1, %s20
    $region7: #{tpu_custom_call.1} parent=1 // loop_footer_branch
      %19 = sbr.rel target = $region3
    $region8: #{tpu_custom_call.1} parent=1 // loop_exit
      _
    %680 = vsyncpa [#allocation3], 1
    %s681 = scalar_lea.sflag [#allocation3], 1
    %682 = vsyncpa %s681, 1
    %683 = vsyncpa [#allocation5], 1
    %s684 = scalar_lea.sflag [#allocation5], 1
    %685 = vsyncpa %s684, 1

</llo_original>
